<compile_context>
chip_gen: v6e
topology: v6e:2x2x1
jax: 0.10.0
libtpu: 0.0.40
codegen_flags: <defaults>
</compile_context>

<pallas_src>
import math
import functools

import jax
import jax.numpy as jnp
from jax.experimental import pallas as pl
from jax.experimental.pallas import tpu as pltpu


def _attn_kernel(x_q_ref, x_kv_ref, wq_ref, wk_ref, wv_ref, wo_ref, rot_ref,
                 cos_q_ref, sin_q_ref, cos_k_ref, sin_k_ref,
                 o_ref,
                 q_s, k_s, v_s, m_s, l_s, acc_s,
                 *, n_head, n_kv_head, head_dim, q_tile, kv_tile):
    """Fused GQA causal attention for one (batch, q-tile, kv-tile) grid step.

    Ref shapes:
      x_q_ref  : (1, Tq, C)  bf16      x_kv_ref : (1, Tk, C)  bf16
      wq_ref   : (n_head, C, hd) bf16  wk_ref/wv_ref : (n_kv, C, hd) bf16
      wo_ref   : (n_head, hd, C) bf16  rot_ref  : (hd, hd)    f32
      cos_*/sin_* : (Tq|Tk, hd) f32    o_ref    : (1, Tq, C)  f32
    Scratch:
      q_s (n_kv, n_rep*Tq, hd) bf16, k_s/v_s (n_kv, Tk, hd) bf16,
      m_s/l_s (n_kv, n_rep*Tq, 1) f32, acc_s (n_kv, n_rep*Tq, hd) f32
    """
    qi = pl.program_id(1)
    ki = pl.program_id(2)
    n_rep = n_head // n_kv_head
    scale = 1.0 / math.sqrt(head_dim)

    @pl.when(ki <= qi)          # causal: kv tiles after the q tile contribute nothing
    def _process():
        rot = rot_ref[...]      # (hd, hd): x @ rot -> (-x_odd, x_even) interleaved

        def rope(t, cos, sin):
            # pairwise complex rotation, evaluated on the MXU (no lane shuffles)
            return t * cos + jnp.dot(t, rot, preferred_element_type=jnp.float32) * sin

        # ---- first kv tile of this (b, q-tile): project+rotate Q, init flash state
        @pl.when(ki == 0)
        def _init():
            xq = x_q_ref[0]                                   # (Tq, C) bf16
            cq = cos_q_ref[...]
            sq = sin_q_ref[...]
            for h in range(n_head):
                g, r = divmod(h, n_rep)
                qh = jnp.dot(xq, wq_ref[h], preferred_element_type=jnp.float32)
                qh = rope(qh, cq, sq) * scale                 # fold 1/sqrt(hd) into q
                q_s[g, r * q_tile:(r + 1) * q_tile, :] = qh.astype(q_s.dtype)
            m_s[...] = jnp.full_like(m_s, -1e30)
            l_s[...] = jnp.zeros_like(l_s)
            acc_s[...] = jnp.zeros_like(acc_s)

        # ---- project + rotate K/V of the current kv tile (all kv-head groups)
        xkv = x_kv_ref[0]                                     # (Tk, C) bf16
        ck = cos_k_ref[...]
        sk = sin_k_ref[...]
        for g in range(n_kv_head):
            kg = jnp.dot(xkv, wk_ref[g], preferred_element_type=jnp.float32)
            k_s[g] = rope(kg, ck, sk).astype(k_s.dtype)
            vg = jnp.dot(xkv, wv_ref[g], preferred_element_type=jnp.float32)
            v_s[g] = vg.astype(v_s.dtype)

        # ---- online softmax update, batched over GQA kv groups
        q = q_s[...]                                          # (G, R*Tq, hd) bf16
        k = k_s[...]                                          # (G, Tk,  hd)  bf16
        v = v_s[...]                                          # (G, Tk,  hd)  bf16
        s = jnp.einsum('gqd,gkd->gqk', q, k,
                       preferred_element_type=jnp.float32)    # (G, R*Tq, Tk) f32

        q_pos = qi * q_tile + jax.lax.broadcasted_iota(jnp.int32, s.shape, 1) % q_tile
        k_pos = ki * kv_tile + jax.lax.broadcasted_iota(jnp.int32, s.shape, 2)
        s = jnp.where(k_pos > q_pos, jnp.float32(-1e30), s)   # causal mask

        m_prev = m_s[...]
        m_new = jnp.maximum(m_prev, jnp.max(s, axis=-1, keepdims=True))
        alpha = jnp.exp(m_prev - m_new)
        p = jnp.exp(s - m_new)
        l_s[...] = alpha * l_s[...] + jnp.sum(p, axis=-1, keepdims=True)
        acc_s[...] = alpha * acc_s[...] + jnp.einsum(
            'gqk,gkd->gqd', p.astype(v.dtype), v, preferred_element_type=jnp.float32)
        m_s[...] = m_new

        # ---- last contributing kv tile: normalize + output projection into o_ref
        @pl.when(ki == qi)
        def _finalize():
            y = acc_s[...] * pl.reciprocal(l_s[...], approx=True)   # (G, R*Tq, hd) f32
            for h in range(n_head):
                g, r = divmod(h, n_rep)
                yh = y[g, r * q_tile:(r + 1) * q_tile, :].astype(jnp.bfloat16)
                contrib = jnp.dot(yh, wo_ref[h], preferred_element_type=jnp.float32)
                if h == 0:
                    o_ref[0] = contrib                 # accumulate in the VMEM block
                else:
                    o_ref[0] += contrib


def _pick_tile(T, target=256):
    if T <= target:
        return T
    t = target
    while t >= 8:
        if T % t == 0:
            return t
        t //= 2
    return T


def causal_self_attention(x, wqkv_t, wproj_t, cos_half, sin_half,
                          *, n_head, n_kv_head, head_dim):
    """x: (B, T, C) f32; wqkv_t: (C, (n_head+2*n_kv)*hd) == W_attn^T;
    wproj_t: (C, C) == W_proj^T; cos_half/sin_half: (T, hd//2) rotary tables."""
    B, T, C = x.shape
    assert n_head % n_kv_head == 0
    assert C == n_head * head_dim
    n_rep = n_head // n_kv_head
    qd = n_head * head_dim
    kd = n_kv_head * head_dim
    dqkv = qd + 2 * kd

    q_tile = _pick_tile(T)
    kv_tile = q_tile
    nq = T // q_tile
    nk = T // kv_tile

    # ---- wrapper-side layout plumbing (weights only, done once per call) ----
    # Per-head weight slabs so the kernel never slices activations on the lane axis.
    wq = wqkv_t[:, :qd].reshape(C, n_head, head_dim).transpose(1, 0, 2)
    wk = wqkv_t[:, qd:qd + kd].reshape(C, n_kv_head, head_dim).transpose(1, 0, 2)
    wv = wqkv_t[:, qd + kd:].reshape(C, n_kv_head, head_dim).transpose(1, 0, 2)
    wo = wproj_t.reshape(n_head, head_dim, C)
    wq, wk, wv, wo = (w.astype(jnp.bfloat16) for w in (wq, wk, wv, wo))

    # Rotary tables at (T, head_dim): per-pair value duplicated on (even, odd) lanes.
    cos_full = jnp.repeat(cos_half, 2, axis=-1).astype(jnp.float32)
    sin_full = jnp.repeat(sin_half, 2, axis=-1).astype(jnp.float32)

    # Pair-swap matrix: (x @ rot)[2i] = -x[2i+1], (x @ rot)[2i+1] = x[2i].
    idx = jnp.arange(head_dim)
    row, col = idx[:, None], idx[None, :]
    rot = (jnp.where((row % 2 == 0) & (col == row + 1), 1.0, 0.0)
           + jnp.where((row % 2 == 1) & (col == row - 1), -1.0, 0.0)).astype(jnp.float32)

    x_bf = x.astype(jnp.bfloat16)

    kernel = functools.partial(_attn_kernel, n_head=n_head, n_kv_head=n_kv_head,
                               head_dim=head_dim, q_tile=q_tile, kv_tile=kv_tile)

    flops = (2 * B * T * C * dqkv
             + 4 * B * n_head * T * T * head_dim
             + 2 * B * T * C * C)
    transcendentals = B * n_head * T * T
    bytes_accessed = (2 * B * T * C + 4 * B * T * C
                      + 2 * (C * dqkv + C * C) + 8 * T * head_dim)

    return pl.pallas_call(
        kernel,
        out_shape=jax.ShapeDtypeStruct((B, T, C), jnp.float32),
        grid=(B, nq, nk),
        in_specs=[
            pl.BlockSpec((1, q_tile, C), lambda b, i, j: (b, i, 0)),          # x (q tile)
            pl.BlockSpec((1, kv_tile, C), lambda b, i, j: (b, j, 0)),         # x (kv tile)
            pl.BlockSpec((n_head, C, head_dim), lambda b, i, j: (0, 0, 0)),   # Wq per head
            pl.BlockSpec((n_kv_head, C, head_dim), lambda b, i, j: (0, 0, 0)),# Wk per kv head
            pl.BlockSpec((n_kv_head, C, head_dim), lambda b, i, j: (0, 0, 0)),# Wv per kv head
            pl.BlockSpec((n_head, head_dim, C), lambda b, i, j: (0, 0, 0)),   # Wproj per head
            pl.BlockSpec((head_dim, head_dim), lambda b, i, j: (0, 0)),       # rope swap mat
            pl.BlockSpec((q_tile, head_dim), lambda b, i, j: (i, 0)),         # cos (q)
            pl.BlockSpec((q_tile, head_dim), lambda b, i, j: (i, 0)),         # sin (q)
            pl.BlockSpec((kv_tile, head_dim), lambda b, i, j: (j, 0)),        # cos (kv)
            pl.BlockSpec((kv_tile, head_dim), lambda b, i, j: (j, 0)),        # sin (kv)
        ],
        out_specs=pl.BlockSpec((1, q_tile, C), lambda b, i, j: (b, i, 0)),
        scratch_shapes=[
            pltpu.VMEM((n_kv_head, n_rep * q_tile, head_dim), jnp.bfloat16),  # q (grouped)
            pltpu.VMEM((n_kv_head, kv_tile, head_dim), jnp.bfloat16),         # k tile
            pltpu.VMEM((n_kv_head, kv_tile, head_dim), jnp.bfloat16),         # v tile
            pltpu.VMEM((n_kv_head, n_rep * q_tile, 1), jnp.float32),          # running max
            pltpu.VMEM((n_kv_head, n_rep * q_tile, 1), jnp.float32),          # running sum
            pltpu.VMEM((n_kv_head, n_rep * q_tile, head_dim), jnp.float32),   # acc
        ],
        compiler_params=pltpu.CompilerParams(
            dimension_semantics=("parallel", "parallel", "arbitrary"),
            vmem_limit_bytes=48 * 1024 * 1024),
        cost_estimate=pl.CostEstimate(flops=flops,
                                      transcendentals=transcendentals,
                                      bytes_accessed=bytes_accessed),
    )(x_bf, x_bf, wq, wk, wv, wo, rot, cos_full, sin_full, cos_full, sin_full)


# ---------------------------------------------------------------------------
# Pure-JAX reference (mirrors the PyTorch forward: non-flash path, no KV cache,
# causal mask, softmax in float32).
# ---------------------------------------------------------------------------
def reference(x, wqkv_t, wproj_t, cos_half, sin_half, *, n_head, n_kv_head, head_dim):
    B, T, C = x.shape
    qkv = x @ wqkv_t
    q = qkv[..., :n_head * head_dim].reshape(B, T, n_head, head_dim)
    k = qkv[..., n_head * head_dim:(n_head + n_kv_head) * head_dim].reshape(
        B, T, n_kv_head, head_dim)
    v = qkv[..., (n_head + n_kv_head) * head_dim:].reshape(B, T, n_kv_head, head_dim)

    def rope(t):
        tr = t.reshape(*t.shape[:-1], head_dim // 2, 2)
        re, im = tr[..., 0], tr[..., 1]
        c = cos_half[None, :, None, :]
        s = sin_half[None, :, None, :]
        o = jnp.stack([re * c - im * s, re * s + im * c], axis=-1)
        return o.reshape(t.shape)

    q, k = rope(q), rope(k)
    n_rep = n_head // n_kv_head
    k = jnp.repeat(k, n_rep, axis=2)
    v = jnp.repeat(v, n_rep, axis=2)
    q, k, v = (jnp.swapaxes(a, 1, 2) for a in (q, k, v))      # (B, H, T, hd)
    s = (q @ jnp.swapaxes(k, -1, -2)) * (1.0 / math.sqrt(head_dim))
    rowi = jnp.arange(T)[:, None]
    coli = jnp.arange(T)[None, :]
    s = jnp.where(coli > rowi, jnp.finfo(jnp.float32).min, s)
    p = jax.nn.softmax(s, axis=-1)
    y = p @ v
    y = jnp.swapaxes(y, 1, 2).reshape(B, T, C)
    return y @ wproj_t


if __name__ == "__main__":
    # Small config consistent with the module: n_embd = n_head * head_dim.
    B, T = 2, 8
    n_head, n_kv_head, head_dim = 4, 2, 8
    C = n_head * head_dim                        # 32
    dqkv = (n_head + 2 * n_kv_head) * head_dim   # 64

    key = jax.random.PRNGKey(0)
    kx, kw1, kw2 = jax.random.split(key, 3)
    x = jax.random.normal(kx, (B, T, C), dtype=jnp.float32)
    # Linear weights stored pre-transposed as W^T == (in_features, out_features).
    wqkv_t = jax.random.normal(kw1, (C, dqkv), dtype=jnp.float32) * 0.02
    wproj_t = jax.random.normal(kw2, (C, C), dtype=jnp.float32) * 0.02

    # Rotary frequency table (freqs_cis) as cos/sin halves of shape (T, hd/2).
    theta = 10000.0
    inv_freq = 1.0 / (theta ** (jnp.arange(0, head_dim, 2, dtype=jnp.float32) / head_dim))
    ang = jnp.arange(T, dtype=jnp.float32)[:, None] * inv_freq[None, :]
    cos_half, sin_half = jnp.cos(ang), jnp.sin(ang)

    y = causal_self_attention(x, wqkv_t, wproj_t, cos_half, sin_half,
                              n_head=n_head, n_kv_head=n_kv_head, head_dim=head_dim)
    y = jax.block_until_ready(y)

    y_ref = reference(x, wqkv_t, wproj_t, cos_half, sin_half,
                      n_head=n_head, n_kv_head=n_kv_head, head_dim=head_dim)
    assert y.shape == (B, T, C)
    err = float(jnp.max(jnp.abs(y - y_ref)))
    # bf16 MXU inputs -> compare against the f32 reference with a bf16-level tolerance.
    assert jnp.allclose(y, y_ref, rtol=2e-2, atol=1.5e-3), f"max err {err}"

    # TODO(synk): KV-cache decode path (use_kv=True, start_pos>=0) and externally
    # supplied masks are not implemented; kernel covers the training/prefill
    # causal-mask forward.
    print("KERNEL_OK")
</pallas_src>

<mosaic_0001>
module attributes {stable_mosaic.version = 11 : i64} {
  func.func @_attn_kernel(%arg0: i32, %arg1: i32, %arg2: i32, %arg3: memref<1x8x32xbf16, #tpu.memory_space<vmem>>, %arg4: memref<1x8x32xbf16, #tpu.memory_space<vmem>>, %arg5: memref<4x32x8xbf16, #tpu.memory_space<vmem>>, %arg6: memref<2x32x8xbf16, #tpu.memory_space<vmem>>, %arg7: memref<2x32x8xbf16, #tpu.memory_space<vmem>>, %arg8: memref<4x8x32xbf16, #tpu.memory_space<vmem>>, %arg9: memref<8x8xf32, #tpu.memory_space<vmem>>, %arg10: memref<8x8xf32, #tpu.memory_space<vmem>>, %arg11: memref<8x8xf32, #tpu.memory_space<vmem>>, %arg12: memref<8x8xf32, #tpu.memory_space<vmem>>, %arg13: memref<8x8xf32, #tpu.memory_space<vmem>>, %arg14: memref<1x8x32xf32, #tpu.memory_space<vmem>>, %arg15: memref<2x16x8xbf16, #tpu.memory_space<vmem>>, %arg16: memref<2x8x8xbf16, #tpu.memory_space<vmem>>, %arg17: memref<2x8x8xbf16, #tpu.memory_space<vmem>>, %arg18: memref<2x16x1xf32, #tpu.memory_space<vmem>>, %arg19: memref<2x16x1xf32, #tpu.memory_space<vmem>>, %arg20: memref<2x16x8xf32, #tpu.memory_space<vmem>>) attributes {dimension_semantics = [#tpu.dimension_semantics<parallel>, #tpu.dimension_semantics<parallel>, #tpu.dimension_semantics<arbitrary>], iteration_bounds = array<i64: 2, 1, 1>, scalar_prefetch = 0 : i64, scratch_operands = 6 : i64, tpu.core_type = #tpu.core_type<tc>, window_params = [{transform_indices = @transform_0, window_bounds = array<i64: 1, 8, 32>}, {transform_indices = @transform_1, window_bounds = array<i64: 1, 8, 32>}, {pipeline_mode = #tpu.pipeline_mode<synchronous>, transform_indices = @transform_2, window_bounds = array<i64: 4, 32, 8>}, {pipeline_mode = #tpu.pipeline_mode<synchronous>, transform_indices = @transform_3, window_bounds = array<i64: 2, 32, 8>}, {pipeline_mode = #tpu.pipeline_mode<synchronous>, transform_indices = @transform_4, window_bounds = array<i64: 2, 32, 8>}, {pipeline_mode = #tpu.pipeline_mode<synchronous>, transform_indices = @transform_5, window_bounds = array<i64: 4, 8, 32>}, {pipeline_mode = #tpu.pipeline_mode<synchronous>, transform_indices = @transform_6, window_bounds = array<i64: 8, 8>}, {transform_indices = @transform_7, window_bounds = array<i64: 8, 8>}, {transform_indices = @transform_8, window_bounds = array<i64: 8, 8>}, {transform_indices = @transform_9, window_bounds = array<i64: 8, 8>}, {transform_indices = @transform_10, window_bounds = array<i64: 8, 8>}, {transform_indices = @transform_11, window_bounds = array<i64: 1, 8, 32>}]} {
    %0 = arith.cmpi sle, %arg2, %arg1 : i32
    %1 = arith.extui %0 : i1 to i32
    %c0_i32 = arith.constant 0 : i32
    %2 = arith.cmpi ne, %1, %c0_i32 : i32
    scf.if %2 {
      %c0 = arith.constant 0 : index
      %c0_0 = arith.constant 0 : index
      %3 = vector.load %arg9[%c0, %c0_0] : memref<8x8xf32, #tpu.memory_space<vmem>>, vector<8x8xf32>
      %c0_i32_1 = arith.constant 0 : i32
      %4 = arith.cmpi eq, %arg2, %c0_i32_1 : i32
      %5 = arith.extui %4 : i1 to i32
      %c0_i32_2 = arith.constant 0 : i32
      %6 = arith.cmpi ne, %5, %c0_i32_2 : i32
      scf.if %6 {
        %c0_77 = arith.constant 0 : index
        %c0_78 = arith.constant 0 : index
        %c0_79 = arith.constant 0 : index
        %104 = vector.load %arg3[%c0_77, %c0_78, %c0_79] : memref<1x8x32xbf16, #tpu.memory_space<vmem>>, vector<1x8x32xbf16>
        %105 = vector.shape_cast %104 : vector<1x8x32xbf16> to vector<8x32xbf16>
        %c0_80 = arith.constant 0 : index
        %c0_81 = arith.constant 0 : index
        %106 = vector.load %arg10[%c0_80, %c0_81] : memref<8x8xf32, #tpu.memory_space<vmem>>, vector<8x8xf32>
        %c0_82 = arith.constant 0 : index
        %c0_83 = arith.constant 0 : index
        %107 = vector.load %arg11[%c0_82, %c0_83] : memref<8x8xf32, #tpu.memory_space<vmem>>, vector<8x8xf32>
        %c0_84 = arith.constant 0 : index
        %c0_85 = arith.constant 0 : index
        %c0_86 = arith.constant 0 : index
        %108 = vector.load %arg5[%c0_84, %c0_85, %c0_86] : memref<4x32x8xbf16, #tpu.memory_space<vmem>>, vector<1x32x8xbf16>
        %109 = vector.shape_cast %108 : vector<1x32x8xbf16> to vector<32x8xbf16>
        %cst_87 = arith.constant dense<0.000000e+00> : vector<8x8xf32>
        %110 = tpu.matmul %105, %109, %cst_87 {dimension_numbers = #tpu.dot_dimension_numbers<[1], [0], [0], [1], [0, 0, 1, 1], [], []>} : vector<8x32xbf16>, vector<32x8xbf16>, vector<8x8xf32> -> vector<8x8xf32>
        %111 = arith.mulf %110, %106 : vector<8x8xf32>
        %cst_88 = arith.constant dense<0.000000e+00> : vector<8x8xf32>
        %112 = tpu.matmul %110, %3, %cst_88 {dimension_numbers = #tpu.dot_dimension_numbers<[1], [0], [0], [1], [0, 0, 1, 1], [], []>} : vector<8x8xf32>, vector<8x8xf32>, vector<8x8xf32> -> vector<8x8xf32>
        %113 = arith.mulf %112, %107 : vector<8x8xf32>
        %114 = arith.addf %111, %113 : vector<8x8xf32>
        %cst_89 = arith.constant 0.353553385 : f32
        %115 = vector.broadcast %cst_89 : f32 to vector<8x8xf32>
        %116 = arith.mulf %114, %115 : vector<8x8xf32>
        %117 = arith.truncf %116 : vector<8x8xf32> to vector<8x8xbf16>
        %c0_90 = arith.constant 0 : index
        %c0_91 = arith.constant 0 : index
        %c0_92 = arith.constant 0 : index
        %118 = vector.load %arg15[%c0_90, %c0_91, %c0_92] : memref<2x16x8xbf16, #tpu.memory_space<vmem>>, vector<1x8x8xbf16>
        %119 = vector.shape_cast %118 : vector<1x8x8xbf16> to vector<8x8xbf16>
        %120 = vector.shape_cast %117 : vector<8x8xbf16> to vector<1x8x8xbf16>
        tpu.vector_store %arg15[%c0_90, %c0_91, %c0_92], %120 {strides = array<i32>} : memref<2x16x8xbf16, #tpu.memory_space<vmem>>, vector<1x8x8xbf16>,
        %c1_93 = arith.constant 1 : index
        %c0_94 = arith.constant 0 : index
        %c0_95 = arith.constant 0 : index
        %121 = vector.load %arg5[%c1_93, %c0_94, %c0_95] : memref<4x32x8xbf16, #tpu.memory_space<vmem>>, vector<1x32x8xbf16>
        %122 = vector.shape_cast %121 : vector<1x32x8xbf16> to vector<32x8xbf16>
        %cst_96 = arith.constant dense<0.000000e+00> : vector<8x8xf32>
        %123 = tpu.matmul %105, %122, %cst_96 {dimension_numbers = #tpu.dot_dimension_numbers<[1], [0], [0], [1], [0, 0, 1, 1], [], []>} : vector<8x32xbf16>, vector<32x8xbf16>, vector<8x8xf32> -> vector<8x8xf32>
        %124 = arith.mulf %123, %106 : vector<8x8xf32>
        %cst_97 = arith.constant dense<0.000000e+00> : vector<8x8xf32>
        %125 = tpu.matmul %123, %3, %cst_97 {dimension_numbers = #tpu.dot_dimension_numbers<[1], [0], [0], [1], [0, 0, 1, 1], [], []>} : vector<8x8xf32>, vector<8x8xf32>, vector<8x8xf32> -> vector<8x8xf32>
        %126 = arith.mulf %125, %107 : vector<8x8xf32>
        %127 = arith.addf %124, %126 : vector<8x8xf32>
        %cst_98 = arith.constant 0.353553385 : f32
        %128 = vector.broadcast %cst_98 : f32 to vector<8x8xf32>
        %129 = arith.mulf %127, %128 : vector<8x8xf32>
        %130 = arith.truncf %129 : vector<8x8xf32> to vector<8x8xbf16>
        %c0_99 = arith.constant 0 : index
        %c8 = arith.constant 8 : index
        %c0_100 = arith.constant 0 : index
        %131 = vector.load %arg15[%c0_99, %c8, %c0_100] : memref<2x16x8xbf16, #tpu.memory_space<vmem>>, vector<1x8x8xbf16>
        %132 = vector.shape_cast %131 : vector<1x8x8xbf16> to vector<8x8xbf16>
        %133 = vector.shape_cast %130 : vector<8x8xbf16> to vector<1x8x8xbf16>
        tpu.vector_store %arg15[%c0_99, %c8, %c0_100], %133 {strides = array<i32>} : memref<2x16x8xbf16, #tpu.memory_space<vmem>>, vector<1x8x8xbf16>,
        %c2 = arith.constant 2 : index
        %c0_101 = arith.constant 0 : index
        %c0_102 = arith.constant 0 : index
        %134 = vector.load %arg5[%c2, %c0_101, %c0_102] : memref<4x32x8xbf16, #tpu.memory_space<vmem>>, vector<1x32x8xbf16>
        %135 = vector.shape_cast %134 : vector<1x32x8xbf16> to vector<32x8xbf16>
        %cst_103 = arith.constant dense<0.000000e+00> : vector<8x8xf32>
        %136 = tpu.matmul %105, %135, %cst_103 {dimension_numbers = #tpu.dot_dimension_numbers<[1], [0], [0], [1], [0, 0, 1, 1], [], []>} : vector<8x32xbf16>, vector<32x8xbf16>, vector<8x8xf32> -> vector<8x8xf32>
        %137 = arith.mulf %136, %106 : vector<8x8xf32>
        %cst_104 = arith.constant dense<0.000000e+00> : vector<8x8xf32>
        %138 = tpu.matmul %136, %3, %cst_104 {dimension_numbers = #tpu.dot_dimension_numbers<[1], [0], [0], [1], [0, 0, 1, 1], [], []>} : vector<8x8xf32>, vector<8x8xf32>, vector<8x8xf32> -> vector<8x8xf32>
        %139 = arith.mulf %138, %107 : vector<8x8xf32>
        %140 = arith.addf %137, %139 : vector<8x8xf32>
        %cst_105 = arith.constant 0.353553385 : f32
        %141 = vector.broadcast %cst_105 : f32 to vector<8x8xf32>
        %142 = arith.mulf %140, %141 : vector<8x8xf32>
        %143 = arith.truncf %142 : vector<8x8xf32> to vector<8x8xbf16>
        %c1_106 = arith.constant 1 : index
        %c0_107 = arith.constant 0 : index
        %c0_108 = arith.constant 0 : index
        %144 = vector.load %arg15[%c1_106, %c0_107, %c0_108] : memref<2x16x8xbf16, #tpu.memory_space<vmem>>, vector<1x8x8xbf16>
        %145 = vector.shape_cast %144 : vector<1x8x8xbf16> to vector<8x8xbf16>
        %146 = vector.shape_cast %143 : vector<8x8xbf16> to vector<1x8x8xbf16>
        tpu.vector_store %arg15[%c1_106, %c0_107, %c0_108], %146 {strides = array<i32>} : memref<2x16x8xbf16, #tpu.memory_space<vmem>>, vector<1x8x8xbf16>,
        %c3 = arith.constant 3 : index
        %c0_109 = arith.constant 0 : index
        %c0_110 = arith.constant 0 : index
        %147 = vector.load %arg5[%c3, %c0_109, %c0_110] : memref<4x32x8xbf16, #tpu.memory_space<vmem>>, vector<1x32x8xbf16>
        %148 = vector.shape_cast %147 : vector<1x32x8xbf16> to vector<32x8xbf16>
        %cst_111 = arith.constant dense<0.000000e+00> : vector<8x8xf32>
        %149 = tpu.matmul %105, %148, %cst_111 {dimension_numbers = #tpu.dot_dimension_numbers<[1], [0], [0], [1], [0, 0, 1, 1], [], []>} : vector<8x32xbf16>, vector<32x8xbf16>, vector<8x8xf32> -> vector<8x8xf32>
        %150 = arith.mulf %149, %106 : vector<8x8xf32>
        %cst_112 = arith.constant dense<0.000000e+00> : vector<8x8xf32>
        %151 = tpu.matmul %149, %3, %cst_112 {dimension_numbers = #tpu.dot_dimension_numbers<[1], [0], [0], [1], [0, 0, 1, 1], [], []>} : vector<8x8xf32>, vector<8x8xf32>, vector<8x8xf32> -> vector<8x8xf32>
        %152 = arith.mulf %151, %107 : vector<8x8xf32>
        %153 = arith.addf %150, %152 : vector<8x8xf32>
        %cst_113 = arith.constant 0.353553385 : f32
        %154 = vector.broadcast %cst_113 : f32 to vector<8x8xf32>
        %155 = arith.mulf %153, %154 : vector<8x8xf32>
        %156 = arith.truncf %155 : vector<8x8xf32> to vector<8x8xbf16>
        %c1_114 = arith.constant 1 : index
        %c8_115 = arith.constant 8 : index
        %c0_116 = arith.constant 0 : index
        %157 = vector.load %arg15[%c1_114, %c8_115, %c0_116] : memref<2x16x8xbf16, #tpu.memory_space<vmem>>, vector<1x8x8xbf16>
        %158 = vector.shape_cast %157 : vector<1x8x8xbf16> to vector<8x8xbf16>
        %159 = vector.shape_cast %156 : vector<8x8xbf16> to vector<1x8x8xbf16>
        tpu.vector_store %arg15[%c1_114, %c8_115, %c0_116], %159 {strides = array<i32>} : memref<2x16x8xbf16, #tpu.memory_space<vmem>>, vector<1x8x8xbf16>,
        %cst_117 = arith.constant -1.000000e+30 : f32
        %160 = vector.broadcast %cst_117 : f32 to vector<2x16x1xf32>
        %c0_118 = arith.constant 0 : index
        %c0_119 = arith.constant 0 : index
        %c0_120 = arith.constant 0 : index
        %161 = vector.load %arg18[%c0_118, %c0_119, %c0_120] : memref<2x16x1xf32, #tpu.memory_space<vmem>>, vector<2x16x1xf32>
        tpu.vector_store %arg18[%c0_118, %c0_119, %c0_120], %160 {strides = array<i32>} : memref<2x16x1xf32, #tpu.memory_space<vmem>>, vector<2x16x1xf32>,
        %cst_121 = arith.constant 0.000000e+00 : f32
        %162 = vector.broadcast %cst_121 : f32 to vector<2x16x1xf32>
        %c0_122 = arith.constant 0 : index
        %c0_123 = arith.constant 0 : index
        %c0_124 = arith.constant 0 : index
        %163 = vector.load %arg19[%c0_122, %c0_123, %c0_124] : memref<2x16x1xf32, #tpu.memory_space<vmem>>, vector<2x16x1xf32>
        tpu.vector_store %arg19[%c0_122, %c0_123, %c0_124], %162 {strides = array<i32>} : memref<2x16x1xf32, #tpu.memory_space<vmem>>, vector<2x16x1xf32>,
        %cst_125 = arith.constant 0.000000e+00 : f32
        %164 = vector.broadcast %cst_125 : f32 to vector<2x16x8xf32>
        %c0_126 = arith.constant 0 : index
        %c0_127 = arith.constant 0 : index
        %c0_128 = arith.constant 0 : index
        %165 = vector.load %arg20[%c0_126, %c0_127, %c0_128] : memref<2x16x8xf32, #tpu.memory_space<vmem>>, vector<2x16x8xf32>
        tpu.vector_store %arg20[%c0_126, %c0_127, %c0_128], %164 {strides = array<i32>} : memref<2x16x8xf32, #tpu.memory_space<vmem>>, vector<2x16x8xf32>,
      } else {
      }
      %c0_3 = arith.constant 0 : index
      %c0_4 = arith.constant 0 : index
      %c0_5 = arith.constant 0 : index
      %7 = vector.load %arg4[%c0_3, %c0_4, %c0_5] : memref<1x8x32xbf16, #tpu.memory_space<vmem>>, vector<1x8x32xbf16>
      %8 = vector.shape_cast %7 : vector<1x8x32xbf16> to vector<8x32xbf16>
      %c0_6 = arith.constant 0 : index
      %c0_7 = arith.constant 0 : index
      %9 = vector.load %arg12[%c0_6, %c0_7] : memref<8x8xf32, #tpu.memory_space<vmem>>, vector<8x8xf32>
      %c0_8 = arith.constant 0 : index
      %c0_9 = arith.constant 0 : index
      %10 = vector.load %arg13[%c0_8, %c0_9] : memref<8x8xf32, #tpu.memory_space<vmem>>, vector<8x8xf32>
      %c0_10 = arith.constant 0 : index
      %c0_11 = arith.constant 0 : index
      %c0_12 = arith.constant 0 : index
      %11 = vector.load %arg6[%c0_10, %c0_11, %c0_12] : memref<2x32x8xbf16, #tpu.memory_space<vmem>>, vector<1x32x8xbf16>
      %12 = vector.shape_cast %11 : vector<1x32x8xbf16> to vector<32x8xbf16>
      %cst = arith.constant dense<0.000000e+00> : vector<8x8xf32>
      %13 = tpu.matmul %8, %12, %cst {dimension_numbers = #tpu.dot_dimension_numbers<[1], [0], [0], [1], [0, 0, 1, 1], [], []>} : vector<8x32xbf16>, vector<32x8xbf16>, vector<8x8xf32> -> vector<8x8xf32>
      %14 = arith.mulf %13, %9 : vector<8x8xf32>
      %cst_13 = arith.constant dense<0.000000e+00> : vector<8x8xf32>
      %15 = tpu.matmul %13, %3, %cst_13 {dimension_numbers = #tpu.dot_dimension_numbers<[1], [0], [0], [1], [0, 0, 1, 1], [], []>} : vector<8x8xf32>, vector<8x8xf32>, vector<8x8xf32> -> vector<8x8xf32>
      %16 = arith.mulf %15, %10 : vector<8x8xf32>
      %17 = arith.addf %14, %16 : vector<8x8xf32>
      %18 = arith.truncf %17 : vector<8x8xf32> to vector<8x8xbf16>
      %c0_14 = arith.constant 0 : index
      %c0_15 = arith.constant 0 : index
      %c0_16 = arith.constant 0 : index
      %19 = vector.load %arg16[%c0_14, %c0_15, %c0_16] : memref<2x8x8xbf16, #tpu.memory_space<vmem>>, vector<1x8x8xbf16>
      %20 = vector.shape_cast %19 : vector<1x8x8xbf16> to vector<8x8xbf16>
      %21 = vector.shape_cast %18 : vector<8x8xbf16> to vector<1x8x8xbf16>
      tpu.vector_store %arg16[%c0_14, %c0_15, %c0_16], %21 {strides = array<i32>} : memref<2x8x8xbf16, #tpu.memory_space<vmem>>, vector<1x8x8xbf16>,
      %c0_17 = arith.constant 0 : index
      %c0_18 = arith.constant 0 : index
      %c0_19 = arith.constant 0 : index
      %22 = vector.load %arg7[%c0_17, %c0_18, %c0_19] : memref<2x32x8xbf16, #tpu.memory_space<vmem>>, vector<1x32x8xbf16>
      %23 = vector.shape_cast %22 : vector<1x32x8xbf16> to vector<32x8xbf16>
      %cst_20 = arith.constant dense<0.000000e+00> : vector<8x8xf32>
      %24 = tpu.matmul %8, %23, %cst_20 {dimension_numbers = #tpu.dot_dimension_numbers<[1], [0], [0], [1], [0, 0, 1, 1], [], []>} : vector<8x32xbf16>, vector<32x8xbf16>, vector<8x8xf32> -> vector<8x8xf32>
      %25 = arith.truncf %24 : vector<8x8xf32> to vector<8x8xbf16>
      %c0_21 = arith.constant 0 : index
      %c0_22 = arith.constant 0 : index
      %c0_23 = arith.constant 0 : index
      %26 = vector.load %arg17[%c0_21, %c0_22, %c0_23] : memref<2x8x8xbf16, #tpu.memory_space<vmem>>, vector<1x8x8xbf16>
      %27 = vector.shape_cast %26 : vector<1x8x8xbf16> to vector<8x8xbf16>
      %28 = vector.shape_cast %25 : vector<8x8xbf16> to vector<1x8x8xbf16>
      tpu.vector_store %arg17[%c0_21, %c0_22, %c0_23], %28 {strides = array<i32>} : memref<2x8x8xbf16, #tpu.memory_space<vmem>>, vector<1x8x8xbf16>,
      %c1 = arith.constant 1 : index
      %c0_24 = arith.constant 0 : index
      %c0_25 = arith.constant 0 : index
      %29 = vector.load %arg6[%c1, %c0_24, %c0_25] : memref<2x32x8xbf16, #tpu.memory_space<vmem>>, vector<1x32x8xbf16>
      %30 = vector.shape_cast %29 : vector<1x32x8xbf16> to vector<32x8xbf16>
      %cst_26 = arith.constant dense<0.000000e+00> : vector<8x8xf32>
      %31 = tpu.matmul %8, %30, %cst_26 {dimension_numbers = #tpu.dot_dimension_numbers<[1], [0], [0], [1], [0, 0, 1, 1], [], []>} : vector<8x32xbf16>, vector<32x8xbf16>, vector<8x8xf32> -> vector<8x8xf32>
      %32 = arith.mulf %31, %9 : vector<8x8xf32>
      %cst_27 = arith.constant dense<0.000000e+00> : vector<8x8xf32>
      %33 = tpu.matmul %31, %3, %cst_27 {dimension_numbers = #tpu.dot_dimension_numbers<[1], [0], [0], [1], [0, 0, 1, 1], [], []>} : vector<8x8xf32>, vector<8x8xf32>, vector<8x8xf32> -> vector<8x8xf32>
      %34 = arith.mulf %33, %10 : vector<8x8xf32>
      %35 = arith.addf %32, %34 : vector<8x8xf32>
      %36 = arith.truncf %35 : vector<8x8xf32> to vector<8x8xbf16>
      %c1_28 = arith.constant 1 : index
      %c0_29 = arith.constant 0 : index
      %c0_30 = arith.constant 0 : index
      %37 = vector.load %arg16[%c1_28, %c0_29, %c0_30] : memref<2x8x8xbf16, #tpu.memory_space<vmem>>, vector<1x8x8xbf16>
      %38 = vector.shape_cast %37 : vector<1x8x8xbf16> to vector<8x8xbf16>
      %39 = vector.shape_cast %36 : vector<8x8xbf16> to vector<1x8x8xbf16>
      tpu.vector_store %arg16[%c1_28, %c0_29, %c0_30], %39 {strides = array<i32>} : memref<2x8x8xbf16, #tpu.memory_space<vmem>>, vector<1x8x8xbf16>,
      %c1_31 = arith.constant 1 : index
      %c0_32 = arith.constant 0 : index
      %c0_33 = arith.constant 0 : index
      %40 = vector.load %arg7[%c1_31, %c0_32, %c0_33] : memref<2x32x8xbf16, #tpu.memory_space<vmem>>, vector<1x32x8xbf16>
      %41 = vector.shape_cast %40 : vector<1x32x8xbf16> to vector<32x8xbf16>
      %cst_34 = arith.constant dense<0.000000e+00> : vector<8x8xf32>
      %42 = tpu.matmul %8, %41, %cst_34 {dimension_numbers = #tpu.dot_dimension_numbers<[1], [0], [0], [1], [0, 0, 1, 1], [], []>} : vector<8x32xbf16>, vector<32x8xbf16>, vector<8x8xf32> -> vector<8x8xf32>
      %43 = arith.truncf %42 : vector<8x8xf32> to vector<8x8xbf16>
      %c1_35 = arith.constant 1 : index
      %c0_36 = arith.constant 0 : index
      %c0_37 = arith.constant 0 : index
      %44 = vector.load %arg17[%c1_35, %c0_36, %c0_37] : memref<2x8x8xbf16, #tpu.memory_space<vmem>>, vector<1x8x8xbf16>
      %45 = vector.shape_cast %44 : vector<1x8x8xbf16> to vector<8x8xbf16>
      %46 = vector.shape_cast %43 : vector<8x8xbf16> to vector<1x8x8xbf16>
      tpu.vector_store %arg17[%c1_35, %c0_36, %c0_37], %46 {strides = array<i32>} : memref<2x8x8xbf16, #tpu.memory_space<vmem>>, vector<1x8x8xbf16>,
      %c0_38 = arith.constant 0 : index
      %c0_39 = arith.constant 0 : index
      %c0_40 = arith.constant 0 : index
      %47 = vector.load %arg15[%c0_38, %c0_39, %c0_40] : memref<2x16x8xbf16, #tpu.memory_space<vmem>>, vector<2x16x8xbf16>
      %c0_41 = arith.constant 0 : index
      %c0_42 = arith.constant 0 : index
      %c0_43 = arith.constant 0 : index
      %48 = vector.load %arg16[%c0_41, %c0_42, %c0_43] : memref<2x8x8xbf16, #tpu.memory_space<vmem>>, vector<2x8x8xbf16>
      %c0_44 = arith.constant 0 : index
      %c0_45 = arith.constant 0 : index
      %c0_46 = arith.constant 0 : index
      %49 = vector.load %arg17[%c0_44, %c0_45, %c0_46] : memref<2x8x8xbf16, #tpu.memory_space<vmem>>, vector<2x8x8xbf16>
      "tpu.trace_start"() <{level = 10 : i32, message = "gqd,gkd->gqk"}> : () -> ()
      %cst_47 = arith.constant dense<0.000000e+00> : vector<2x16x8xf32>
      %50 = tpu.matmul %47, %48, %cst_47 {dimension_numbers = #tpu.dot_dimension_numbers<[2], [2], [1], [1], [0, 0, 0, 1, 1, 1], [0], [0]>} : vector<2x16x8xbf16>, vector<2x8x8xbf16>, vector<2x16x8xf32> -> vector<2x16x8xf32>
      "tpu.trace_stop"() : () -> ()
      %c8_i32 = arith.constant 8 : i32
      %51 = arith.muli %arg1, %c8_i32 : i32
      %52 = tpu.iota {dimensions = array<i32: 1>} : vector<2x16x8xi32>
      %c8_i32_48 = arith.constant 8 : i32
      %c0_i32_49 = arith.constant 0 : i32
      %53 = arith.cmpi eq, %c8_i32_48, %c0_i32_49 : i32
      %c1_i32 = arith.constant 1 : i32
      %54 = arith.select %53, %c1_i32, %c8_i32_48 : i32
      %55 = vector.broadcast %54 : i32 to vector<2x16x8xi32>
      %56 = arith.remsi %52, %55 : vector<2x16x8xi32>
      %c0_i32_50 = arith.constant 0 : i32
      %57 = vector.broadcast %c0_i32_50 : i32 to vector<2x16x8xi32>
      %58 = arith.cmpi ne, %56, %57 : vector<2x16x8xi32>
      %c0_i32_51 = arith.constant 0 : i32
      %59 = vector.broadcast %c0_i32_51 : i32 to vector<2x16x8xi32>
      %60 = arith.cmpi slt, %56, %59 : vector<2x16x8xi32>
      %c0_i32_52 = arith.constant 0 : i32
      %61 = arith.cmpi slt, %54, %c0_i32_52 : i32
      %62 = vector.broadcast %61 : i1 to vector<2x16x8xi1>
      %63 = vector.broadcast %62 : vector<2x16x8xi1> to vector<2x16x8xi1>
      %64 = arith.xori %60, %63 : vector<2x16x8xi1>
      %65 = arith.andi %64, %58 : vector<2x16x8xi1>
      %66 = vector.broadcast %54 : i32 to vector<2x16x8xi32>
      %67 = arith.addi %56, %66 : vector<2x16x8xi32>
      %68 = arith.select %65, %67, %56 : vector<2x16x8xi1>, vector<2x16x8xi32>
      %69 = vector.broadcast %51 : i32 to vector<2x16x8xi32>
      %70 = arith.addi %69, %68 : vector<2x16x8xi32>
      %c8_i32_53 = arith.constant 8 : i32
      %71 = arith.muli %arg2, %c8_i32_53 : i32
      %72 = tpu.iota {dimensions = array<i32: 2>} : vector<2x16x8xi32>
      %73 = vector.broadcast %71 : i32 to vector<2x16x8xi32>
      %74 = arith.addi %73, %72 : vector<2x16x8xi32>
      %75 = arith.cmpi sgt, %74, %70 : vector<2x16x8xi32>
      %cst_54 = arith.constant -1.000000e+30 : f32
      %76 = vector.broadcast %cst_54 : f32 to vector<2x16x8xf32>
      %77 = arith.select %75, %76, %50 : vector<2x16x8xi1>, vector<2x16x8xf32>
      %c0_55 = arith.constant 0 : index
      %c0_56 = arith.constant 0 : index
      %c0_57 = arith.constant 0 : index
      %78 = vector.load %arg18[%c0_55, %c0_56, %c0_57] : memref<2x16x1xf32, #tpu.memory_space<vmem>>, vector<2x16x1xf32>
      %cst_58 = arith.constant dense<0xFF800000> : vector<2x16xf32>
      %79 = vector.multi_reduction <maximumf>, %77, %cst_58 [2] : vector<2x16x8xf32> to vector<2x16xf32>
      %80 = vector.shape_cast %79 : vector<2x16xf32> to vector<2x16x1xf32>
      %81 = arith.maximumf %78, %80 : vector<2x16x1xf32>
      %82 = arith.subf %78, %81 : vector<2x16x1xf32>
      %83 = math.exp %82 : vector<2x16x1xf32>
      %84 = vector.broadcast %81 : vector<2x16x1xf32> to vector<2x16x8xf32>
      %85 = arith.subf %77, %84 : vector<2x16x8xf32>
      %86 = math.exp %85 : vector<2x16x8xf32>
      %c0_59 = arith.constant 0 : index
      %c0_60 = arith.constant 0 : index
      %c0_61 = arith.constant 0 : index
      %87 = vector.load %arg19[%c0_59, %c0_60, %c0_61] : memref<2x16x1xf32, #tpu.memory_space<vmem>>, vector<2x16x1xf32>
      %88 = arith.mulf %83, %87 : vector<2x16x1xf32>
      %cst_62 = arith.constant dense<0.000000e+00> : vector<2x16xf32>
      %89 = vector.multi_reduction <add>, %86, %cst_62 [2] : vector<2x16x8xf32> to vector<2x16xf32>
      %90 = vector.shape_cast %89 : vector<2x16xf32> to vector<2x16x1xf32>
      %91 = arith.addf %88, %90 : vector<2x16x1xf32>
      %c0_63 = arith.constant 0 : index
      %c0_64 = arith.constant 0 : index
      %c0_65 = arith.constant 0 : index
      %92 = vector.load %arg19[%c0_63, %c0_64, %c0_65] : memref<2x16x1xf32, #tpu.memory_space<vmem>>, vector<2x16x1xf32>
      tpu.vector_store %arg19[%c0_63, %c0_64, %c0_65], %91 {strides = array<i32>} : memref<2x16x1xf32, #tpu.memory_space<vmem>>, vector<2x16x1xf32>,
      %c0_66 = arith.constant 0 : index
      %c0_67 = arith.constant 0 : index
      %c0_68 = arith.constant 0 : index
      %93 = vector.load %arg20[%c0_66, %c0_67, %c0_68] : memref<2x16x8xf32, #tpu.memory_space<vmem>>, vector<2x16x8xf32>
      %94 = vector.broadcast %83 : vector<2x16x1xf32> to vector<2x16x8xf32>
      %95 = arith.mulf %94, %93 : vector<2x16x8xf32>
      %96 = arith.truncf %86 : vector<2x16x8xf32> to vector<2x16x8xbf16>
      "tpu.trace_start"() <{level = 10 : i32, message = "gqk,gkd->gqd"}> : () -> ()
      %cst_69 = arith.constant dense<0.000000e+00> : vector<2x16x8xf32>
      %97 = tpu.matmul %96, %49, %cst_69 {dimension_numbers = #tpu.dot_dimension_numbers<[2], [1], [1], [2], [0, 0, 0, 1, 1, 2], [0], [0]>} : vector<2x16x8xbf16>, vector<2x8x8xbf16>, vector<2x16x8xf32> -> vector<2x16x8xf32>
      "tpu.trace_stop"() : () -> ()
      %98 = arith.addf %95, %97 : vector<2x16x8xf32>
      %c0_70 = arith.constant 0 : index
      %c0_71 = arith.constant 0 : index
      %c0_72 = arith.constant 0 : index
      %99 = vector.load %arg20[%c0_70, %c0_71, %c0_72] : memref<2x16x8xf32, #tpu.memory_space<vmem>>, vector<2x16x8xf32>
      tpu.vector_store %arg20[%c0_70, %c0_71, %c0_72], %98 {strides = array<i32>} : memref<2x16x8xf32, #tpu.memory_space<vmem>>, vector<2x16x8xf32>,
      %c0_73 = arith.constant 0 : index
      %c0_74 = arith.constant 0 : index
      %c0_75 = arith.constant 0 : index
      %100 = vector.load %arg18[%c0_73, %c0_74, %c0_75] : memref<2x16x1xf32, #tpu.memory_space<vmem>>, vector<2x16x1xf32>
      tpu.vector_store %arg18[%c0_73, %c0_74, %c0_75], %81 {strides = array<i32>} : memref<2x16x1xf32, #tpu.memory_space<vmem>>, vector<2x16x1xf32>,
      %101 = arith.cmpi eq, %arg2, %arg1 : i32
      %102 = arith.extui %101 : i1 to i32
      %c0_i32_76 = arith.constant 0 : i32
      %103 = arith.cmpi ne, %102, %c0_i32_76 : i32
      scf.if %103 {
        %c0_77 = arith.constant 0 : index
        %c0_78 = arith.constant 0 : index
        %c0_79 = arith.constant 0 : index
        %104 = vector.load %arg20[%c0_77, %c0_78, %c0_79] : memref<2x16x8xf32, #tpu.memory_space<vmem>>, vector<2x16x8xf32>
        %c0_80 = arith.constant 0 : index
        %c0_81 = arith.constant 0 : index
        %c0_82 = arith.constant 0 : index
        %105 = vector.load %arg19[%c0_80, %c0_81, %c0_82] : memref<2x16x1xf32, #tpu.memory_space<vmem>>, vector<2x16x1xf32>
        %106 = tpu.reciprocal %105 {approx = true} : vector<2x16x1xf32> -> vector<2x16x1xf32>
        %107 = vector.broadcast %106 : vector<2x16x1xf32> to vector<2x16x8xf32>
        %108 = arith.mulf %104, %107 : vector<2x16x8xf32>
        %109 = vector.extract_strided_slice %108 {offsets = [0, 0, 0], sizes = [1, 8, 8], strides = [1, 1, 1]} : vector<2x16x8xf32> to vector<1x8x8xf32>
        %110 = vector.shape_cast %109 : vector<1x8x8xf32> to vector<8x8xf32>
        %111 = arith.truncf %110 : vector<8x8xf32> to vector<8x8xbf16>
        %c0_83 = arith.constant 0 : index
        %c0_84 = arith.constant 0 : index
        %c0_85 = arith.constant 0 : index
        %112 = vector.load %arg8[%c0_83, %c0_84, %c0_85] : memref<4x8x32xbf16, #tpu.memory_space<vmem>>, vector<1x8x32xbf16>
        %113 = vector.shape_cast %112 : vector<1x8x32xbf16> to vector<8x32xbf16>
        %cst_86 = arith.constant dense<0.000000e+00> : vector<8x32xf32>
        %114 = tpu.matmul %111, %113, %cst_86 {dimension_numbers = #tpu.dot_dimension_numbers<[1], [0], [0], [1], [0, 0, 1, 1], [], []>} : vector<8x8xbf16>, vector<8x32xbf16>, vector<8x32xf32> -> vector<8x32xf32>
        %c0_87 = arith.constant 0 : index
        %c0_88 = arith.constant 0 : index
        %c0_89 = arith.constant 0 : index
        %115 = vector.load %arg14[%c0_87, %c0_88, %c0_89] : memref<1x8x32xf32, #tpu.memory_space<vmem>>, vector<1x8x32xf32>
        %116 = vector.shape_cast %115 : vector<1x8x32xf32> to vector<8x32xf32>
        %117 = vector.shape_cast %114 : vector<8x32xf32> to vector<1x8x32xf32>
        tpu.vector_store %arg14[%c0_87, %c0_88, %c0_89], %117 {strides = array<i32>} : memref<1x8x32xf32, #tpu.memory_space<vmem>>, vector<1x8x32xf32>,
        %118 = vector.extract_strided_slice %108 {offsets = [0, 8, 0], sizes = [1, 8, 8], strides = [1, 1, 1]} : vector<2x16x8xf32> to vector<1x8x8xf32>
        %119 = vector.shape_cast %118 : vector<1x8x8xf32> to vector<8x8xf32>
        %120 = arith.truncf %119 : vector<8x8xf32> to vector<8x8xbf16>
        %c1_90 = arith.constant 1 : index
        %c0_91 = arith.constant 0 : index
        %c0_92 = arith.constant 0 : index
        %121 = vector.load %arg8[%c1_90, %c0_91, %c0_92] : memref<4x8x32xbf16, #tpu.memory_space<vmem>>, vector<1x8x32xbf16>
        %122 = vector.shape_cast %121 : vector<1x8x32xbf16> to vector<8x32xbf16>
        %cst_93 = arith.constant dense<0.000000e+00> : vector<8x32xf32>
        %123 = tpu.matmul %120, %122, %cst_93 {dimension_numbers = #tpu.dot_dimension_numbers<[1], [0], [0], [1], [0, 0, 1, 1], [], []>} : vector<8x8xbf16>, vector<8x32xbf16>, vector<8x32xf32> -> vector<8x32xf32>
        %c0_94 = arith.constant 0 : index
        %c0_95 = arith.constant 0 : index
        %c0_96 = arith.constant 0 : index
        %124 = vector.load %arg14[%c0_94, %c0_95, %c0_96] : memref<1x8x32xf32, #tpu.memory_space<vmem>>, vector<1x8x32xf32>
        %125 = vector.shape_cast %124 : vector<1x8x32xf32> to vector<8x32xf32>
        %126 = arith.addf %125, %123 : vector<8x32xf32>
        %c0_97 = arith.constant 0 : index
        %c0_98 = arith.constant 0 : index
        %c0_99 = arith.constant 0 : index
        %127 = vector.load %arg14[%c0_97, %c0_98, %c0_99] : memref<1x8x32xf32, #tpu.memory_space<vmem>>, vector<1x8x32xf32>
        %128 = vector.shape_cast %127 : vector<1x8x32xf32> to vector<8x32xf32>
        %129 = vector.shape_cast %126 : vector<8x32xf32> to vector<1x8x32xf32>
        tpu.vector_store %arg14[%c0_97, %c0_98, %c0_99], %129 {strides = array<i32>} : memref<1x8x32xf32, #tpu.memory_space<vmem>>, vector<1x8x32xf32>,
        %130 = vector.extract_strided_slice %108 {offsets = [1, 0, 0], sizes = [1, 8, 8], strides = [1, 1, 1]} : vector<2x16x8xf32> to vector<1x8x8xf32>
        %131 = vector.shape_cast %130 : vector<1x8x8xf32> to vector<8x8xf32>
        %132 = arith.truncf %131 : vector<8x8xf32> to vector<8x8xbf16>
        %c2 = arith.constant 2 : index
        %c0_100 = arith.constant 0 : index
        %c0_101 = arith.constant 0 : index
        %133 = vector.load %arg8[%c2, %c0_100, %c0_101] : memref<4x8x32xbf16, #tpu.memory_space<vmem>>, vector<1x8x32xbf16>
        %134 = vector.shape_cast %133 : vector<1x8x32xbf16> to vector<8x32xbf16>
        %cst_102 = arith.constant dense<0.000000e+00> : vector<8x32xf32>
        %135 = tpu.matmul %132, %134, %cst_102 {dimension_numbers = #tpu.dot_dimension_numbers<[1], [0], [0], [1], [0, 0, 1, 1], [], []>} : vector<8x8xbf16>, vector<8x32xbf16>, vector<8x32xf32> -> vector<8x32xf32>
        %c0_103 = arith.constant 0 : index
        %c0_104 = arith.constant 0 : index
        %c0_105 = arith.constant 0 : index
        %136 = vector.load %arg14[%c0_103, %c0_104, %c0_105] : memref<1x8x32xf32, #tpu.memory_space<vmem>>, vector<1x8x32xf32>
        %137 = vector.shape_cast %136 : vector<1x8x32xf32> to vector<8x32xf32>
        %138 = arith.addf %137, %135 : vector<8x32xf32>
        %c0_106 = arith.constant 0 : index
        %c0_107 = arith.constant 0 : index
        %c0_108 = arith.constant 0 : index
        %139 = vector.load %arg14[%c0_106, %c0_107, %c0_108] : memref<1x8x32xf32, #tpu.memory_space<vmem>>, vector<1x8x32xf32>
        %140 = vector.shape_cast %139 : vector<1x8x32xf32> to vector<8x32xf32>
        %141 = vector.shape_cast %138 : vector<8x32xf32> to vector<1x8x32xf32>
        tpu.vector_store %arg14[%c0_106, %c0_107, %c0_108], %141 {strides = array<i32>} : memref<1x8x32xf32, #tpu.memory_space<vmem>>, vector<1x8x32xf32>,
        %142 = vector.extract_strided_slice %108 {offsets = [1, 8, 0], sizes = [1, 8, 8], strides = [1, 1, 1]} : vector<2x16x8xf32> to vector<1x8x8xf32>
        %143 = vector.shape_cast %142 : vector<1x8x8xf32> to vector<8x8xf32>
        %144 = arith.truncf %143 : vector<8x8xf32> to vector<8x8xbf16>
        %c3 = arith.constant 3 : index
        %c0_109 = arith.constant 0 : index
        %c0_110 = arith.constant 0 : index
        %145 = vector.load %arg8[%c3, %c0_109, %c0_110] : memref<4x8x32xbf16, #tpu.memory_space<vmem>>, vector<1x8x32xbf16>
        %146 = vector.shape_cast %145 : vector<1x8x32xbf16> to vector<8x32xbf16>
        %cst_111 = arith.constant dense<0.000000e+00> : vector<8x32xf32>
        %147 = tpu.matmul %144, %146, %cst_111 {dimension_numbers = #tpu.dot_dimension_numbers<[1], [0], [0], [1], [0, 0, 1, 1], [], []>} : vector<8x8xbf16>, vector<8x32xbf16>, vector<8x32xf32> -> vector<8x32xf32>
        %c0_112 = arith.constant 0 : index
        %c0_113 = arith.constant 0 : index
        %c0_114 = arith.constant 0 : index
        %148 = vector.load %arg14[%c0_112, %c0_113, %c0_114] : memref<1x8x32xf32, #tpu.memory_space<vmem>>, vector<1x8x32xf32>
        %149 = vector.shape_cast %148 : vector<1x8x32xf32> to vector<8x32xf32>
        %150 = arith.addf %149, %147 : vector<8x32xf32>
        %c0_115 = arith.constant 0 : index
        %c0_116 = arith.constant 0 : index
        %c0_117 = arith.constant 0 : index
        %151 = vector.load %arg14[%c0_115, %c0_116, %c0_117] : memref<1x8x32xf32, #tpu.memory_space<vmem>>, vector<1x8x32xf32>
        %152 = vector.shape_cast %151 : vector<1x8x32xf32> to vector<8x32xf32>
        %153 = vector.shape_cast %150 : vector<8x32xf32> to vector<1x8x32xf32>
        tpu.vector_store %arg14[%c0_115, %c0_116, %c0_117], %153 {strides = array<i32>} : memref<1x8x32xf32, #tpu.memory_space<vmem>>, vector<1x8x32xf32>,
      } else {
      }
    } else {
    }
    return
  }
  func.func @transform_0(%arg0: i32, %arg1: i32, %arg2: i32) -> (i32, i32, i32) {
    %c0_i32 = arith.constant 0 : i32
    %c0_i32_0 = arith.constant 0 : i32
    return %arg0, %arg1, %c0_i32 : i32, i32, i32
  }
  func.func @transform_1(%arg0: i32, %arg1: i32, %arg2: i32) -> (i32, i32, i32) {
    %c0_i32 = arith.constant 0 : i32
    %c0_i32_0 = arith.constant 0 : i32
    return %arg0, %arg2, %c0_i32 : i32, i32, i32
  }
  func.func @transform_2(%arg0: i32, %arg1: i32, %arg2: i32) -> (i32, i32, i32) {
    %c0_i32 = arith.constant 0 : i32
    %c0_i32_0 = arith.constant 0 : i32
    %c0_i32_1 = arith.constant 0 : i32
    %c0_i32_2 = arith.constant 0 : i32
    return %c0_i32, %c0_i32_0, %c0_i32_1 : i32, i32, i32
  }
  func.func @transform_3(%arg0: i32, %arg1: i32, %arg2: i32) -> (i32, i32, i32) {
    %c0_i32 = arith.constant 0 : i32
    %c0_i32_0 = arith.constant 0 : i32
    %c0_i32_1 = arith.constant 0 : i32
    %c0_i32_2 = arith.constant 0 : i32
    return %c0_i32, %c0_i32_0, %c0_i32_1 : i32, i32, i32
  }
  func.func @transform_4(%arg0: i32, %arg1: i32, %arg2: i32) -> (i32, i32, i32) {
    %c0_i32 = arith.constant 0 : i32
    %c0_i32_0 = arith.constant 0 : i32
    %c0_i32_1 = arith.constant 0 : i32
    %c0_i32_2 = arith.constant 0 : i32
    return %c0_i32, %c0_i32_0, %c0_i32_1 : i32, i32, i32
  }
  func.func @transform_5(%arg0: i32, %arg1: i32, %arg2: i32) -> (i32, i32, i32) {
    %c0_i32 = arith.constant 0 : i32
    %c0_i32_0 = arith.constant 0 : i32
    %c0_i32_1 = arith.constant 0 : i32
    %c0_i32_2 = arith.constant 0 : i32
    return %c0_i32, %c0_i32_0, %c0_i32_1 : i32, i32, i32
  }
  func.func @transform_6(%arg0: i32, %arg1: i32, %arg2: i32) -> (i32, i32) {
    %c0_i32 = arith.constant 0 : i32
    %c0_i32_0 = arith.constant 0 : i32
    %c0_i32_1 = arith.constant 0 : i32
    return %c0_i32, %c0_i32_0 : i32, i32
  }
  func.func @transform_7(%arg0: i32, %arg1: i32, %arg2: i32) -> (i32, i32) {
    %c0_i32 = arith.constant 0 : i32
    %c0_i32_0 = arith.constant 0 : i32
    return %arg1, %c0_i32 : i32, i32
  }
  func.func @transform_8(%arg0: i32, %arg1: i32, %arg2: i32) -> (i32, i32) {
    %c0_i32 = arith.constant 0 : i32
    %c0_i32_0 = arith.constant 0 : i32
    return %arg1, %c0_i32 : i32, i32
  }
  func.func @transform_9(%arg0: i32, %arg1: i32, %arg2: i32) -> (i32, i32) {
    %c0_i32 = arith.constant 0 : i32
    %c0_i32_0 = arith.constant 0 : i32
    return %arg2, %c0_i32 : i32, i32
  }
  func.func @transform_10(%arg0: i32, %arg1: i32, %arg2: i32) -> (i32, i32) {
    %c0_i32 = arith.constant 0 : i32
    %c0_i32_0 = arith.constant 0 : i32
    return %arg2, %c0_i32 : i32, i32
  }
  func.func @transform_11(%arg0: i32, %arg1: i32, %arg2: i32) -> (i32, i32, i32) {
    %c0_i32 = arith.constant 0 : i32
    %c0_i32_0 = arith.constant 0 : i32
    return %arg0, %arg1, %c0_i32 : i32, i32, i32
  }
}

</mosaic_0001>

<llo_original>
// kernel: tpu_custom_call.1
$region0: #{tpu_custom_call.1}
  #allocation0 [shape = 'u32[]', space=smem, size = 0x4, offset = 0x4, fixed_abs, tag = 'smem constant byte address 0x4 - core index']
  #allocation1 [shape = 'u32[144,128]{1,0:T(1,128)}', space=vmem, size = 0x12000, scoped, tag = 'internal scratch']
  #allocation2 [shape = 'bf16[2,16,8]{2,1,0:T(8,128)(2,1)}', space=vmem, size = 0x2000, scoped, tag = 'scratch operand']
  #allocation3 [shape = 'bf16[2,8,8]{2,1,0:T(8,128)(2,1)}', space=vmem, size = 0x1000, scoped, tag = 'scratch operand']
  #allocation4 [shape = 'bf16[2,8,8]{2,1,0:T(8,128)(2,1)}', space=vmem, size = 0x1000, scoped, tag = 'scratch operand']
  #allocation5 [shape = 'f32[2,16,1]{2,1,0:T(8,128)}', space=vmem, size = 0x4000, scoped, tag = 'scratch operand']
  #allocation6 [shape = 'f32[2,16,1]{2,1,0:T(8,128)}', space=vmem, size = 0x4000, scoped, tag = 'scratch operand']
  #allocation7 [shape = 'f32[2,16,8]{2,1,0:T(8,128)}', space=vmem, size = 0x4000, scoped, tag = 'scratch operand']
  %s0 = inlined_call_operand.vmem [shape: bf16[2,8,32], index: 0, kind: input, shape index: {}]
  %s1 = inlined_call_operand.vmem [shape: bf16[2,8,32], index: 1, kind: input, shape index: {}]
  %s2 = inlined_call_operand.vmem [shape: bf16[4,32,8], index: 2, kind: input, shape index: {}]
  %s3 = inlined_call_operand.vmem [shape: bf16[2,32,8], index: 3, kind: input, shape index: {}]
  %s4 = inlined_call_operand.vmem [shape: bf16[2,32,8], index: 4, kind: input, shape index: {}]
  %s5 = inlined_call_operand.vmem [shape: bf16[4,8,32], index: 5, kind: input, shape index: {}]
  %s6 = inlined_call_operand.vmem [shape: f32[8,8], index: 6, kind: input, shape index: {}]
  %s7 = inlined_call_operand.vmem [shape: f32[8,8], index: 7, kind: input, shape index: {}]
  %s8 = inlined_call_operand.vmem [shape: f32[8,8], index: 8, kind: input, shape index: {}]
  %s9 = inlined_call_operand.vmem [shape: f32[8,8], index: 9, kind: input, shape index: {}]
  %s10 = inlined_call_operand.vmem [shape: f32[8,8], index: 10, kind: input, shape index: {}]
  %s11 = inlined_call_operand.hbm [shape: f32[2,8,32], index: 11, kind: output, shape index: {}]
  %s12 = sld [smem:[#allocation0]]
  $region89: #{tpu_custom_call.1} parent=0
    _
  %s14 = ssub.s32 1, %s12
  %s15 = scalar_select 0, %s14, %s12
  $region1: #{tpu_custom_call.1} parent=0
    #allocation8 [shape = 'u8[8192]{0}', space=vmem, size = 0x2000, scoped, tag = 'output window, operand 0']
    #allocation9 [shape = 's32[2]{0}', space=sflag, size = 0x8, scoped, tag = 'scoped memory for tpu_custom_call.1']
    %16 = vsyncpa [#allocation9], 0
    %s17 = scalar_lea.sflag [#allocation9], 1
    %18 = vsyncpa %s17, 0
    loop: start=0, step=1, limit=4
    $region2: #{tpu_custom_call.1} parent=1 // loop_pre_header
      _
    $region3: #{tpu_custom_call.1} parent=1 // loop_header
      %s20 = sphi 0, %s24
      %p21 = scmp.ge.s32.totalorder %s20, 4
      %s27 = sphi 0, %s46
      %s28 = sphi 0, %s42
      %s29 = sphi 0, %s38
      %s30 = sphi 0, %s27
      %s31 = sphi 0, %s28
      %s32 = sphi 0, %s29
      %s33 = sphi 0, %s30
      %s34 = sphi 0, %s31
      %s35 = sphi 0, %s32
      %s51 = sphi 0, %s53
      %s54 = sphi 0, %s51
      %s55 = sphi 0, %s54
      %s71 = sphi 0, %s55
      %s79 = sphi 0, %s81
      %s82 = sphi 0, %s79
      %s83 = sphi 0, %s82
      %s99 = sphi 0, %s83
      %s103 = sphi 0, %s103
      %s105 = sphi 0, %s103
      %s106 = sphi 0, %s105
      %s120 = sphi 0, %s106
      %s124 = sphi 0, %s124
      %s126 = sphi 0, %s124
      %s127 = sphi 0, %s126
      %s141 = sphi 0, %s127
      %s145 = sphi 0, %s145
      %s147 = sphi 0, %s145
      %s148 = sphi 0, %s147
      %s162 = sphi 0, %s148
      %s166 = sphi 0, %s166
      %s168 = sphi 0, %s166
      %s169 = sphi 0, %s168
      %s183 = sphi 0, %s169
      %s187 = sphi 0, %s187
      %s189 = sphi 0, %s187
      %s190 = sphi 0, %s189
      %s204 = sphi 0, %s190
      %s210 = sphi 0, %s212
      %s213 = sphi 0, %s210
      %s214 = sphi 0, %s213
      %s230 = sphi 0, %s214
      %s236 = sphi 0, %s238
      %s239 = sphi 0, %s236
      %s240 = sphi 0, %s239
      %s256 = sphi 0, %s240
      %s262 = sphi 0, %s264
      %s265 = sphi 0, %s262
      %s266 = sphi 0, %s265
      %s282 = sphi 0, %s266
      %s288 = sphi 0, %s290
      %s291 = sphi 0, %s288
      %s292 = sphi 0, %s291
      %s308 = sphi 0, %s292
      %s316 = sphi 0, %s318
      %s319 = sphi 0, %s316
      %s320 = sphi 0, %s319
      %s336 = sphi 0, %s320
    $region4: #{tpu_custom_call.1} parent=1 // loop_header_branch
      %23 = sbr.rel (%p21) target = $region8
    $region5: #{tpu_custom_call.1} parent=1 // loop_body
      %s25 = ssub.s32 %s20, 1
      %s26 = ssub.s32 %s20, 2
      %s36 = sadd.s32 1, %s29
      %p37 = scmp.ge.s32.totalorder %s36, 1
      %s38 = scalar_select %p37, 0, %s36
      %s39 = sadd.s32 1, %s28
      %s40 = scalar_select %p37, %s39, %s28
      %p41 = scmp.ge.s32.totalorder %s40, 1
      %s42 = scalar_select %p41, 0, %s40
      %s43 = sadd.s32 1, %s27
      %s44 = scalar_select %p41, %s43, %s27
      %p45 = scmp.ge.s32.totalorder %s44, 2
      %s46 = scalar_select %p45, 0, %s44
      %s47 = ssub.s32 %s27, %s46
      %s48 = ssub.s32 %s28, %s42
      %s49 = sor.u32 %s47, %s48
      %p50 = scmp.eq.s32.totalorder %s49, 0
      %s52 = sadd.s32 %s51, 1
      %s53 = scalar_select %p50, %s51, %s52
      %p56 = pneg %p50
      %p57 = scmp.eq.s32.totalorder %s20, 1
      %p58 = por %p56, %p57
      %p59 = scmp.ne.s32.totalorder %s51, %s54
      %p60 = scmp.eq.s32.totalorder %s20, 0
      %p61 = por %p59, %p60
      %p62 = scmp.ne.s32.totalorder %s51, %s54
      %p63 = scmp.eq.s32.totalorder %s25, 1
      %p64 = por %p62, %p63
      %p65 = scmp.ne.s32.totalorder %s54, %s55
      %p66 = scmp.eq.s32.totalorder %s25, 0
      %p67 = por %p65, %p66
      %p68 = scmp.ne.s32.totalorder %s54, %s55
      %p69 = scmp.eq.s32.totalorder %s26, 1
      %p70 = por %p68, %p69
      %p72 = scmp.ne.s32.totalorder %s55, %s71
      %p73 = scmp.eq.s32.totalorder %s26, 0
      %p74 = por %p72, %p73
      %s75 = ssub.s32 %s27, %s46
      %s76 = ssub.s32 %s29, %s38
      %s77 = sor.u32 %s75, %s76
      %p78 = scmp.eq.s32.totalorder %s77, 0
      %s80 = sadd.s32 %s79, 1
      %s81 = scalar_select %p78, %s79, %s80
      %p84 = pneg %p78
      %p85 = scmp.eq.s32.totalorder %s20, 1
      %p86 = por %p84, %p85
      %p87 = scmp.ne.s32.totalorder %s79, %s82
      %p88 = scmp.eq.s32.totalorder %s20, 0
      %p89 = por %p87, %p88
      %p90 = scmp.ne.s32.totalorder %s79, %s82
      %p91 = scmp.eq.s32.totalorder %s25, 1
      %p92 = por %p90, %p91
      %p93 = scmp.ne.s32.totalorder %s82, %s83
      %p94 = scmp.eq.s32.totalorder %s25, 0
      %p95 = por %p93, %p94
      %p96 = scmp.ne.s32.totalorder %s82, %s83
      %p97 = scmp.eq.s32.totalorder %s26, 1
      %p98 = por %p96, %p97
      %p100 = scmp.ne.s32.totalorder %s83, %s99
      %p101 = scmp.eq.s32.totalorder %s26, 0
      %p102 = por %p100, %p101
      %s104 = sadd.s32 %s103, 1
      %p107 = scmp.eq.s32.totalorder %s20, 1
      %p108 = scmp.ne.s32.totalorder %s103, %s105
      %p109 = scmp.eq.s32.totalorder %s20, 0
      %p110 = por %p108, %p109
      %p111 = scmp.ne.s32.totalorder %s103, %s105
      %p112 = scmp.eq.s32.totalorder %s25, 1
      %p113 = por %p111, %p112
      %p114 = scmp.ne.s32.totalorder %s105, %s106
      %p115 = scmp.eq.s32.totalorder %s25, 0
      %p116 = por %p114, %p115
      %p117 = scmp.ne.s32.totalorder %s105, %s106
      %p118 = scmp.eq.s32.totalorder %s26, 1
      %p119 = por %p117, %p118
      %p121 = scmp.ne.s32.totalorder %s106, %s120
      %p122 = scmp.eq.s32.totalorder %s26, 0
      %p123 = por %p121, %p122
      %s125 = sadd.s32 %s124, 1
      %p128 = scmp.eq.s32.totalorder %s20, 1
      %p129 = scmp.ne.s32.totalorder %s124, %s126
      %p130 = scmp.eq.s32.totalorder %s20, 0
      %p131 = por %p129, %p130
      %p132 = scmp.ne.s32.totalorder %s124, %s126
      %p133 = scmp.eq.s32.totalorder %s25, 1
      %p134 = por %p132, %p133
      %p135 = scmp.ne.s32.totalorder %s126, %s127
      %p136 = scmp.eq.s32.totalorder %s25, 0
      %p137 = por %p135, %p136
      %p138 = scmp.ne.s32.totalorder %s126, %s127
      %p139 = scmp.eq.s32.totalorder %s26, 1
      %p140 = por %p138, %p139
      %p142 = scmp.ne.s32.totalorder %s127, %s141
      %p143 = scmp.eq.s32.totalorder %s26, 0
      %p144 = por %p142, %p143
      %s146 = sadd.s32 %s145, 1
      %p149 = scmp.eq.s32.totalorder %s20, 1
      %p150 = scmp.ne.s32.totalorder %s145, %s147
      %p151 = scmp.eq.s32.totalorder %s20, 0
      %p152 = por %p150, %p151
      %p153 = scmp.ne.s32.totalorder %s145, %s147
      %p154 = scmp.eq.s32.totalorder %s25, 1
      %p155 = por %p153, %p154
      %p156 = scmp.ne.s32.totalorder %s147, %s148
      %p157 = scmp.eq.s32.totalorder %s25, 0
      %p158 = por %p156, %p157
      %p159 = scmp.ne.s32.totalorder %s147, %s148
      %p160 = scmp.eq.s32.totalorder %s26, 1
      %p161 = por %p159, %p160
      %p163 = scmp.ne.s32.totalorder %s148, %s162
      %p164 = scmp.eq.s32.totalorder %s26, 0
      %p165 = por %p163, %p164
      %s167 = sadd.s32 %s166, 1
      %p170 = scmp.eq.s32.totalorder %s20, 1
      %p171 = scmp.ne.s32.totalorder %s166, %s168
      %p172 = scmp.eq.s32.totalorder %s20, 0
      %p173 = por %p171, %p172
      %p174 = scmp.ne.s32.totalorder %s166, %s168
      %p175 = scmp.eq.s32.totalorder %s25, 1
      %p176 = por %p174, %p175
      %p177 = scmp.ne.s32.totalorder %s168, %s169
      %p178 = scmp.eq.s32.totalorder %s25, 0
      %p179 = por %p177, %p178
      %p180 = scmp.ne.s32.totalorder %s168, %s169
      %p181 = scmp.eq.s32.totalorder %s26, 1
      %p182 = por %p180, %p181
      %p184 = scmp.ne.s32.totalorder %s169, %s183
      %p185 = scmp.eq.s32.totalorder %s26, 0
      %p186 = por %p184, %p185
      %s188 = sadd.s32 %s187, 1
      %p191 = scmp.eq.s32.totalorder %s20, 1
      %p192 = scmp.ne.s32.totalorder %s187, %s189
      %p193 = scmp.eq.s32.totalorder %s20, 0
      %p194 = por %p192, %p193
      %p195 = scmp.ne.s32.totalorder %s187, %s189
      %p196 = scmp.eq.s32.totalorder %s25, 1
      %p197 = por %p195, %p196
      %p198 = scmp.ne.s32.totalorder %s189, %s190
      %p199 = scmp.eq.s32.totalorder %s25, 0
      %p200 = por %p198, %p199
      %p201 = scmp.ne.s32.totalorder %s189, %s190
      %p202 = scmp.eq.s32.totalorder %s26, 1
      %p203 = por %p201, %p202
      %p205 = scmp.ne.s32.totalorder %s190, %s204
      %p206 = scmp.eq.s32.totalorder %s26, 0
      %p207 = por %p205, %p206
      %s208 = ssub.s32 %s28, %s42
      %p209 = scmp.eq.s32.totalorder %s208, 0
      %s211 = sadd.s32 %s210, 1
      %s212 = scalar_select %p209, %s210, %s211
      %p215 = pneg %p209
      %p216 = scmp.eq.s32.totalorder %s20, 1
      %p217 = por %p215, %p216
      %p218 = scmp.ne.s32.totalorder %s210, %s213
      %p219 = scmp.eq.s32.totalorder %s20, 0
      %p220 = por %p218, %p219
      %p221 = scmp.ne.s32.totalorder %s210, %s213
      %p222 = scmp.eq.s32.totalorder %s25, 1
      %p223 = por %p221, %p222
      %p224 = scmp.ne.s32.totalorder %s213, %s214
      %p225 = scmp.eq.s32.totalorder %s25, 0
      %p226 = por %p224, %p225
      %p227 = scmp.ne.s32.totalorder %s213, %s214
      %p228 = scmp.eq.s32.totalorder %s26, 1
      %p229 = por %p227, %p228
      %p231 = scmp.ne.s32.totalorder %s214, %s230
      %p232 = scmp.eq.s32.totalorder %s26, 0
      %p233 = por %p231, %p232
      %s234 = ssub.s32 %s28, %s42
      %p235 = scmp.eq.s32.totalorder %s234, 0
      %s237 = sadd.s32 %s236, 1
      %s238 = scalar_select %p235, %s236, %s237
      %p241 = pneg %p235
      %p242 = scmp.eq.s32.totalorder %s20, 1
      %p243 = por %p241, %p242
      %p244 = scmp.ne.s32.totalorder %s236, %s239
      %p245 = scmp.eq.s32.totalorder %s20, 0
      %p246 = por %p244, %p245
      %p247 = scmp.ne.s32.totalorder %s236, %s239
      %p248 = scmp.eq.s32.totalorder %s25, 1
      %p249 = por %p247, %p248
      %p250 = scmp.ne.s32.totalorder %s239, %s240
      %p251 = scmp.eq.s32.totalorder %s25, 0
      %p252 = por %p250, %p251
      %p253 = scmp.ne.s32.totalorder %s239, %s240
      %p254 = scmp.eq.s32.totalorder %s26, 1
      %p255 = por %p253, %p254
      %p257 = scmp.ne.s32.totalorder %s240, %s256
      %p258 = scmp.eq.s32.totalorder %s26, 0
      %p259 = por %p257, %p258
      %s260 = ssub.s32 %s29, %s38
      %p261 = scmp.eq.s32.totalorder %s260, 0
      %s263 = sadd.s32 %s262, 1
      %s264 = scalar_select %p261, %s262, %s263
      %p267 = pneg %p261
      %p268 = scmp.eq.s32.totalorder %s20, 1
      %p269 = por %p267, %p268
      %p270 = scmp.ne.s32.totalorder %s262, %s265
      %p271 = scmp.eq.s32.totalorder %s20, 0
      %p272 = por %p270, %p271
      %p273 = scmp.ne.s32.totalorder %s262, %s265
      %p274 = scmp.eq.s32.totalorder %s25, 1
      %p275 = por %p273, %p274
      %p276 = scmp.ne.s32.totalorder %s265, %s266
      %p277 = scmp.eq.s32.totalorder %s25, 0
      %p278 = por %p276, %p277
      %p279 = scmp.ne.s32.totalorder %s265, %s266
      %p280 = scmp.eq.s32.totalorder %s26, 1
      %p281 = por %p279, %p280
      %p283 = scmp.ne.s32.totalorder %s266, %s282
      %p284 = scmp.eq.s32.totalorder %s26, 0
      %p285 = por %p283, %p284
      %s286 = ssub.s32 %s29, %s38
      %p287 = scmp.eq.s32.totalorder %s286, 0
      %s289 = sadd.s32 %s288, 1
      %s290 = scalar_select %p287, %s288, %s289
      %p293 = pneg %p287
      %p294 = scmp.eq.s32.totalorder %s20, 1
      %p295 = por %p293, %p294
      %p296 = scmp.ne.s32.totalorder %s288, %s291
      %p297 = scmp.eq.s32.totalorder %s20, 0
      %p298 = por %p296, %p297
      %p299 = scmp.ne.s32.totalorder %s288, %s291
      %p300 = scmp.eq.s32.totalorder %s25, 1
      %p301 = por %p299, %p300
      %p302 = scmp.ne.s32.totalorder %s291, %s292
      %p303 = scmp.eq.s32.totalorder %s25, 0
      %p304 = por %p302, %p303
      %p305 = scmp.ne.s32.totalorder %s291, %s292
      %p306 = scmp.eq.s32.totalorder %s26, 1
      %p307 = por %p305, %p306
      %p309 = scmp.ne.s32.totalorder %s292, %s308
      %p310 = scmp.eq.s32.totalorder %s26, 0
      %p311 = por %p309, %p310
      %s312 = ssub.s32 %s27, %s46
      %s313 = ssub.s32 %s28, %s42
      %s314 = sor.u32 %s312, %s313
      %p315 = scmp.eq.s32.totalorder %s314, 0
      %s317 = sadd.s32 %s316, 1
      %s318 = scalar_select %p315, %s316, %s317
      %p321 = pneg %p315
      %p322 = scmp.eq.s32.totalorder %s20, 1
      %p323 = por %p321, %p322
      %p324 = scmp.ne.s32.totalorder %s316, %s319
      %p325 = scmp.eq.s32.totalorder %s20, 0
      %p326 = por %p324, %p325
      %p327 = scmp.ne.s32.totalorder %s316, %s319
      %p328 = scmp.eq.s32.totalorder %s25, 1
      %p329 = por %p327, %p328
      %p330 = scmp.ne.s32.totalorder %s319, %s320
      %p331 = scmp.eq.s32.totalorder %s25, 0
      %p332 = por %p330, %p331
      %p333 = scmp.ne.s32.totalorder %s319, %s320
      %p334 = scmp.eq.s32.totalorder %s26, 1
      %p335 = por %p333, %p334
      %p337 = scmp.ne.s32.totalorder %s320, %s336
      %p338 = scmp.eq.s32.totalorder %s26, 0
      %p339 = por %p337, %p338
      %p340 = scmp.le.s32.totalorder 1, %s20
      %p341 = scmp.lt.s32.totalorder %s20, 3
      %p342 = pnand %p340, %p341
      %p343 = pneg %p342
      // Predicated region
      $region9: #{tpu_custom_call.1} parent=5 // pred_check
        _
      $region10: #{tpu_custom_call.1} parent=5 // pred_check_branch
        %345 = sbr.rel (%p342) target = $region12
      $region11: #{tpu_custom_call.1} parent=5 // pred_region
        %s346 = ssub.s32 %s20, 1
        // Predicated region
        $region13: #{tpu_custom_call.1} parent=11 // pred_check
          %p347 = pneg %p116
        $region14: #{tpu_custom_call.1} parent=11 // pred_check_branch
          %349 = sbr.rel (%p347) target = $region16
        $region15: #{tpu_custom_call.1} parent=11 // pred_region
          _
        $region16: #{tpu_custom_call.1} parent=11 // pred_fallthru
          _
        // Predicated region
        $region17: #{tpu_custom_call.1} parent=11 // pred_check
          %p350 = pneg %p137
        $region18: #{tpu_custom_call.1} parent=11 // pred_check_branch
          %352 = sbr.rel (%p350) target = $region20
        $region19: #{tpu_custom_call.1} parent=11 // pred_region
          _
        $region20: #{tpu_custom_call.1} parent=11 // pred_fallthru
          _
        // Predicated region
        $region21: #{tpu_custom_call.1} parent=11 // pred_check
          %p353 = pneg %p158
        $region22: #{tpu_custom_call.1} parent=11 // pred_check_branch
          %355 = sbr.rel (%p353) target = $region24
        $region23: #{tpu_custom_call.1} parent=11 // pred_region
          _
        $region24: #{tpu_custom_call.1} parent=11 // pred_fallthru
          _
        // Predicated region
        $region25: #{tpu_custom_call.1} parent=11 // pred_check
          %p356 = pneg %p179
        $region26: #{tpu_custom_call.1} parent=11 // pred_check_branch
          %358 = sbr.rel (%p356) target = $region28
        $region27: #{tpu_custom_call.1} parent=11 // pred_region
          _
        $region28: #{tpu_custom_call.1} parent=11 // pred_fallthru
          _
        // Predicated region
        $region29: #{tpu_custom_call.1} parent=11 // pred_check
          %p359 = pneg %p200
        $region30: #{tpu_custom_call.1} parent=11 // pred_check_branch
          %361 = sbr.rel (%p359) target = $region32
        $region31: #{tpu_custom_call.1} parent=11 // pred_region
          _
        $region32: #{tpu_custom_call.1} parent=11 // pred_fallthru
          _
        // Predicated region
        $region33: #{tpu_custom_call.1} parent=11 // pred_check
          %p362 = pneg %p226
        $region34: #{tpu_custom_call.1} parent=11 // pred_check_branch
          %364 = sbr.rel (%p362) target = $region36
        $region35: #{tpu_custom_call.1} parent=11 // pred_region
          %p365 = scmp.lt.s32.totalorder %s31, 0
          %s366 = scalar_select %p365, %s31, 0
          %s367 = smul.addr %s366, 8
          %s368 = scalar_lea.vmem %s7, %s367
        $region36: #{tpu_custom_call.1} parent=11 // pred_fallthru
          _
        // Predicated region
        $region37: #{tpu_custom_call.1} parent=11 // pred_check
          %p369 = pneg %p252
        $region38: #{tpu_custom_call.1} parent=11 // pred_check_branch
          %371 = sbr.rel (%p369) target = $region40
        $region39: #{tpu_custom_call.1} parent=11 // pred_region
          %p372 = scmp.lt.s32.totalorder %s31, 0
          %s373 = scalar_select %p372, %s31, 0
          %s374 = smul.addr %s373, 8
          %s375 = scalar_lea.vmem %s8, %s374
        $region40: #{tpu_custom_call.1} parent=11 // pred_fallthru
          _
        // Predicated region
        $region41: #{tpu_custom_call.1} parent=11 // pred_check
          %p376 = pneg %p278
        $region42: #{tpu_custom_call.1} parent=11 // pred_check_branch
          %378 = sbr.rel (%p376) target = $region44
        $region43: #{tpu_custom_call.1} parent=11 // pred_region
          %p379 = scmp.lt.s32.totalorder %s32, 0
          %s380 = scalar_select %p379, %s32, 0
          %s381 = smul.addr %s380, 8
          %s382 = scalar_lea.vmem %s9, %s381
        $region44: #{tpu_custom_call.1} parent=11 // pred_fallthru
          _
        // Predicated region
        $region45: #{tpu_custom_call.1} parent=11 // pred_check
          %p383 = pneg %p304
        $region46: #{tpu_custom_call.1} parent=11 // pred_check_branch
          %385 = sbr.rel (%p383) target = $region48
        $region47: #{tpu_custom_call.1} parent=11 // pred_region
          %p386 = scmp.lt.s32.totalorder %s32, 0
          %s387 = scalar_select %p386, %s32, 0
          %s388 = smul.addr %s387, 8
          %s389 = scalar_lea.vmem %s10, %s388
        $region48: #{tpu_custom_call.1} parent=11 // pred_fallthru
          _
      $region12: #{tpu_custom_call.1} parent=5 // pred_fallthru
        _
      %p390 = scmp.lt.s32.totalorder %s20, 2
      // Predicated region
      $region49: #{tpu_custom_call.1} parent=5 // pred_check
        %p391 = pneg %p390
      $region50: #{tpu_custom_call.1} parent=5 // pred_check_branch
        %393 = sbr.rel (%p391) target = $region52
      $region51: #{tpu_custom_call.1} parent=5 // pred_region
        // Predicated region
        $region53: #{tpu_custom_call.1} parent=51 // pred_check
          %p394 = pneg %p61
        $region54: #{tpu_custom_call.1} parent=51 // pred_check_branch
          %396 = sbr.rel (%p394) target = $region56
        $region55: #{tpu_custom_call.1} parent=51 // pred_region
          %p397 = scmp.lt.s32.totalorder %s27, 1
          %s398 = scalar_select %p397, %s27, 1
          %p399 = scmp.lt.s32.totalorder %s28, 0
          %s400 = scalar_select %p399, %s28, 0
          %s401 = sadd.s32 %s400, %s398
          %s402 = smul.addr %s401, 4
          %s403 = scalar_lea.vmem %s0, %s402
        $region56: #{tpu_custom_call.1} parent=51 // pred_fallthru
          _
        // Predicated region
        $region57: #{tpu_custom_call.1} parent=51 // pred_check
          %p404 = pneg %p89
        $region58: #{tpu_custom_call.1} parent=51 // pred_check_branch
          %406 = sbr.rel (%p404) target = $region60
        $region59: #{tpu_custom_call.1} parent=51 // pred_region
          %p407 = scmp.lt.s32.totalorder %s27, 1
          %s408 = scalar_select %p407, %s27, 1
          %p409 = scmp.lt.s32.totalorder %s29, 0
          %s410 = scalar_select %p409, %s29, 0
          %s411 = sadd.s32 %s410, %s408
          %s412 = smul.addr %s411, 4
          %s413 = scalar_lea.vmem %s1, %s412
        $region60: #{tpu_custom_call.1} parent=51 // pred_fallthru
          _
      $region52: #{tpu_custom_call.1} parent=5 // pred_fallthru
        _
      %p414 = scmp.le.s32.totalorder 1, %s20
      %p415 = scmp.lt.s32.totalorder %s20, 3
      %p416 = pnand %p414, %p415
      %p417 = pneg %p416
      // Predicated region
      $region61: #{tpu_custom_call.1} parent=5 // pred_check
        _
      $region62: #{tpu_custom_call.1} parent=5 // pred_check_branch
        %419 = sbr.rel (%p416) target = $region64
      $region63: #{tpu_custom_call.1} parent=5 // pred_region
        %s420 = ssub.s32 %s20, 1
        %p421 = scmp.lt.s32.totalorder %s30, 1
        %s422 = scalar_select %p421, %s30, 1
        %p423 = scmp.lt.s32.totalorder %s31, 0
        %s424 = scalar_select %p423, %s31, 0
        %s425 = sadd.s32 %s424, %s422
        %s426 = smul.addr %s425, 4
        %s427 = scalar_lea.vmem %s0, %s426
        %p428 = pneg %p67
        %p429 = pneg %p64
        %p430 = scmp.lt.s32.totalorder %s30, 1
        %s431 = scalar_select %p430, %s30, 1
        %p432 = scmp.lt.s32.totalorder %s32, 0
        %s433 = scalar_select %p432, %s32, 0
        %s434 = sadd.s32 %s433, %s431
        %s435 = smul.addr %s434, 4
        %s436 = scalar_lea.vmem %s1, %s435
        %p437 = pneg %p95
        %p438 = pneg %p92
        %p439 = pneg %p116
        %p440 = pneg %p113
        %p441 = pneg %p137
        %p442 = pneg %p134
        %p443 = pneg %p158
        %p444 = pneg %p155
        %p445 = pneg %p179
        %p446 = pneg %p176
        %p447 = pneg %p200
        %p448 = pneg %p197
        %p449 = scmp.lt.s32.totalorder %s31, 0
        %s450 = scalar_select %p449, %s31, 0
        %s451 = smul.addr %s450, 8
        %s452 = scalar_lea.vmem %s7, %s451
        %p453 = pneg %p226
        %p454 = pneg %p223
        %p455 = scmp.lt.s32.totalorder %s31, 0
        %s456 = scalar_select %p455, %s31, 0
        %s457 = smul.addr %s456, 8
        %s458 = scalar_lea.vmem %s8, %s457
        %p459 = pneg %p252
        %p460 = pneg %p249
        %p461 = scmp.lt.s32.totalorder %s32, 0
        %s462 = scalar_select %p461, %s32, 0
        %s463 = smul.addr %s462, 8
        %s464 = scalar_lea.vmem %s9, %s463
        %p465 = pneg %p278
        %p466 = pneg %p275
        %p467 = scmp.lt.s32.totalorder %s32, 0
        %s468 = scalar_select %p467, %s32, 0
        %s469 = smul.addr %s468, 8
        %s470 = scalar_lea.vmem %s10, %s469
        %p471 = pneg %p304
        %p472 = pneg %p301
        %p473 = pneg %p332
        %p474 = pneg %p329
        %s475 = sand.u32 %s319, 1
        %s476 = scalar_lea.sflag [#allocation9], %s475
        %s477 = sand.u32 %s319, 1
        %s478 = smul.addr %s477, 8
        %s479 = scalar_lea.vmem [#allocation8], %s478
        %p480 = scmp.lt.s32.totalorder %s30, 1
        %s481 = scalar_select %p480, %s30, 1
        %p482 = scmp.lt.s32.totalorder %s31, 0
        %s483 = scalar_select %p482, %s31, 0
        %s484 = sadd.s32 %s483, %s481
        %s485 = smul.addr %s484, 4
        %s486 = scalar_lea.vmem %s0, %s485
        %p487 = scmp.lt.s32.totalorder %s30, 1
        %s488 = scalar_select %p487, %s30, 1
        %p489 = scmp.lt.s32.totalorder %s32, 0
        %s490 = scalar_select %p489, %s32, 0
        %s491 = sadd.s32 %s490, %s488
        %s492 = smul.addr %s491, 4
        %s493 = scalar_lea.vmem %s1, %s492
        %p494 = scmp.lt.s32.totalorder %s31, 0
        %s495 = scalar_select %p494, %s31, 0
        %s496 = smul.addr %s495, 8
        %s497 = scalar_lea.vmem %s7, %s496
        %p498 = scmp.lt.s32.totalorder %s31, 0
        %s499 = scalar_select %p498, %s31, 0
        %s500 = smul.addr %s499, 8
        %s501 = scalar_lea.vmem %s8, %s500
        %p502 = scmp.lt.s32.totalorder %s32, 0
        %s503 = scalar_select %p502, %s32, 0
        %s504 = smul.addr %s503, 8
        %s505 = scalar_lea.vmem %s9, %s504
        %p506 = scmp.lt.s32.totalorder %s32, 0
        %s507 = scalar_select %p506, %s32, 0
        %s508 = smul.addr %s507, 8
        %s509 = scalar_lea.vmem %s10, %s508
        %p511 = scmp.le.s32.totalorder %s32, %s31
        // Predicated region
        $region65: #{tpu_custom_call.1} parent=63 // pred_check
          %p512 = pneg %p511
        $region66: #{tpu_custom_call.1} parent=63 // pred_check_branch
          %514 = sbr.rel (%p512) target = $region68
        $region67: #{tpu_custom_call.1} parent=63 // pred_region
          %v515 = vld [vmem:[%s6] sm:$0xff]
          %p516 = scmp.eq.s32.totalorder %s32, 0
          // Predicated region
          $region69: #{tpu_custom_call.1} parent=67 // pred_check
            %p517 = pneg %p516
          $region70: #{tpu_custom_call.1} parent=67 // pred_check_branch
            %519 = sbr.rel (%p517) target = $region72
          $region71: #{tpu_custom_call.1} parent=67 // pred_region
            %v520 = vld [vmem:[%s486] sm:$0xf]
            %v521 = vld [vmem:[%s497] sm:$0xff]
            %v522 = vld [vmem:[%s501] sm:$0xff]
            %v523 = vld [vmem:[%s2] sm:$0xf]
            %v524 = vld [vmem:[%s2 + $0x4] sm:$0xf]
            %v525 = vld [vmem:[%s2 + $0x8] sm:$0xf]
            %v526 = vld [vmem:[%s2 + $0xc] sm:$0xf]
            %v531 = vunpack.c.l.b16 %v523
            %v532 = vunpack.c.l.b16 %v524
            %v533 = vunpack.c.l.b16 %v525
            %v534 = vunpack.c.l.b16 %v526
            %v535 = vpack.c.b16 %v532, %v531
            %v536 = vpack.c.b16 %v534, %v533
            %vm539 = vcmask 261120
            %v541 = vsel %vm539, %v520, 0
            %543 = vmatprep.subr.bf16.mxu0 0
            %544 = vmatpush1.bf16.msra.mxu0 0
            %545 = vmatprep.subr.bf16.mxu0 0
            %546 = vmatpush1.bf16.msra.mxu0 0
            %547 = vmatprep.subr.bf16.mxu0 0
            %548 = vmatpush1.bf16.msra.mxu0 0
            %549 = vmatprep.subr.bf16.mxu0 0
            %550 = vmatpush1.bf16.msra.mxu0 0
            %551 = vmatprep.subr.bf16.mxu0 0
            %552 = vmatpush1.bf16.msra.mxu0 0
            %553 = vmatprep.subr.bf16.mxu0 0
            %554 = vmatpush1.bf16.msra.mxu0 0
            %555 = vmatprep.subr.bf16.mxu0 0
            %556 = vmatpush1.bf16.msra.mxu0 %v536
            %557 = vmatprep.subr.bf16.mxu0 0
            %558 = vmatpush1.bf16.msra.mxu0 %v535
            %559 = vmatprep.subr.bf16.mxu0 0
            %560 = vmatpush2.bf16.msra.mxu0 0
            %561 = vmatprep.subr.bf16.mxu0 0
            %562 = vmatpush2.bf16.msra.mxu0 0
            %563 = vmatprep.subr.bf16.mxu0 0
            %564 = vmatpush2.bf16.msra.mxu0 0
            %565 = vmatprep.subr.bf16.mxu0 0
            %566 = vmatpush2.bf16.msra.mxu0 0
            %567 = vmatprep.subr.bf16.mxu0 0
            %568 = vmatpush2.bf16.msra.mxu0 0
            %569 = vmatprep.subr.bf16.mxu0 0
            %570 = vmatpush2.bf16.msra.mxu0 0
            %571 = vmatprep.subr.bf16.mxu0 0
            %572 = vmatpush2.bf16.msra.mxu0 0
            %573 = vmatprep.subr.bf16.mxu0 0
            %574 = vmatpush2.bf16.msra.mxu0 0
            %575 = vmatprep.mubr.bf16.mxu0 0
            %576 = vmatmul.mubr.bf16.gmra.mxu0 %v541
            %v577 = vpop.f32.mrf.mxu0
            %v578 = vadd.f32 0.0, %v577
            %v579 = vpop.f32.mrf.mxu0
            %v580 = vpop.f32.mrf.mxu0
            %v581 = vpop.f32.mrf.mxu0
            %582 = vdwg.mxu0
            %v583 = vmul.f32 %v578, %v521
            %vm584 = vcmask 64512
            %v586 = vsel %vm584, %v578, 0
            %588 = vmatprep.subr.mxu0 0.0
            %589 = vmatpush1.msra.mxu0 0.0
            %590 = vmatprep.subr.mxu0 0.0
            %591 = vmatpush1.msra.mxu0 0.0
            %592 = vmatprep.subr.mxu0 0.0
            %593 = vmatpush1.msra.mxu0 0.0
            %594 = vmatprep.subr.mxu0 0.0
            %595 = vmatpush1.msra.mxu0 0.0
            %596 = vmatprep.subr.mxu0 0.0
            %597 = vmatpush1.msra.mxu0 0.0
            %598 = vmatprep.subr.mxu0 0.0
            %599 = vmatpush1.msra.mxu0 0.0
            %600 = vmatprep.subr.mxu0 0.0
            %601 = vmatpush1.msra.mxu0 0.0
            %602 = vmatprep.subr.mxu0 0.0
            %603 = vmatpush1.msra.mxu0 0.0
            %604 = vmatprep.subr.mxu0 0.0
            %605 = vmatpush1.msra.mxu0 0.0
            %606 = vmatprep.subr.mxu0 0.0
            %607 = vmatpush1.msra.mxu0 0.0
            %608 = vmatprep.subr.mxu0 0.0
            %609 = vmatpush1.msra.mxu0 0.0
            %610 = vmatprep.subr.mxu0 0.0
            %611 = vmatpush1.msra.mxu0 0.0
            %612 = vmatprep.subr.mxu0 0.0
            %613 = vmatpush1.msra.mxu0 0.0
            %614 = vmatprep.subr.mxu0 0.0
            %615 = vmatpush1.msra.mxu0 0.0
            %616 = vmatprep.subr.mxu0 0.0
            %617 = vmatpush1.msra.mxu0 0.0
            %618 = vmatprep.subr.mxu0 0.0
            %619 = vmatpush1.msra.mxu0 %v515
            %620 = vmatprep.subr.mxu0 0.0
            %621 = vmatpush2.msra.mxu0 0.0
            %622 = vmatprep.subr.mxu0 0.0
            %623 = vmatpush2.msra.mxu0 0.0
            %624 = vmatprep.subr.mxu0 0.0
            %625 = vmatpush2.msra.mxu0 0.0
            %626 = vmatprep.subr.mxu0 0.0
            %627 = vmatpush2.msra.mxu0 0.0
            %628 = vmatprep.subr.mxu0 0.0
            %629 = vmatpush2.msra.mxu0 0.0
            %630 = vmatprep.subr.mxu0 0.0
            %631 = vmatpush2.msra.mxu0 0.0
            %632 = vmatprep.subr.mxu0 0.0
            %633 = vmatpush2.msra.mxu0 0.0
            %634 = vmatprep.subr.mxu0 0.0
            %635 = vmatpush2.msra.mxu0 0.0
            %636 = vmatprep.subr.mxu0 0.0
            %637 = vmatpush2.msra.mxu0 0.0
            %638 = vmatprep.subr.mxu0 0.0
            %639 = vmatpush2.msra.mxu0 0.0
            %640 = vmatprep.subr.mxu0 0.0
            %641 = vmatpush2.msra.mxu0 0.0
            %642 = vmatprep.subr.mxu0 0.0
            %643 = vmatpush2.msra.mxu0 0.0
            %644 = vmatprep.subr.mxu0 0.0
            %645 = vmatpush2.msra.mxu0 0.0
            %646 = vmatprep.subr.mxu0 0.0
            %647 = vmatpush2.msra.mxu0 0.0
            %648 = vmatprep.subr.mxu0 0.0
            %649 = vmatpush2.msra.mxu0 0.0
            %650 = vmatprep.subr.mxu0 0.0
            %651 = vmatpush2.msra.mxu0 0.0
            %652 = vmatprep.mubr.f32.mxu0 0.0
            %653 = vmatmul.mubr.f32.gmra.mxu0 %v586
            %v654 = vpop.f32.mrf.mxu0
            %v655 = vadd.f32 0.0, %v654
            %v656 = vpop.f32.mrf.mxu0
            %657 = vdwg.mxu0
            %v658 = vmul.f32 %v655, %v522
            %v659 = vadd.f32 %v583, %v658
            %v660 = vmul.f32 %v659, 0.35355338
            %v661 = vpack.c.bf16 %v660, %v660
            %vm662 = vcmask 60416
            %663 = vst.msk [vmem:[#allocation2] sm:$0xf] %vm662, %v661
            %s664 = scalar_lea.vmem %s2, 16
            %v665 = vld [vmem:[%s664] sm:$0xf]
            %v666 = vld [vmem:[%s664 + $0x4] sm:$0xf]
            %v667 = vld [vmem:[%s664 + $0x8] sm:$0xf]
            %v668 = vld [vmem:[%s664 + $0xc] sm:$0xf]
            %v673 = vunpack.c.l.b16 %v665
            %v674 = vunpack.c.l.b16 %v666
            %v675 = vunpack.c.l.b16 %v667
            %v676 = vunpack.c.l.b16 %v668
            %v677 = vpack.c.b16 %v674, %v673
            %v678 = vpack.c.b16 %v676, %v675
            %681 = vmatprep.subr.bf16.mxu0 0
            %682 = vmatpush1.bf16.msra.mxu0 0
            %683 = vmatprep.subr.bf16.mxu0 0
            %684 = vmatpush1.bf16.msra.mxu0 0
            %685 = vmatprep.subr.bf16.mxu0 0
            %686 = vmatpush1.bf16.msra.mxu0 0
            %687 = vmatprep.subr.bf16.mxu0 0
            %688 = vmatpush1.bf16.msra.mxu0 0
            %689 = vmatprep.subr.bf16.mxu0 0
            %690 = vmatpush1.bf16.msra.mxu0 0
            %691 = vmatprep.subr.bf16.mxu0 0
            %692 = vmatpush1.bf16.msra.mxu0 0
            %693 = vmatprep.subr.bf16.mxu0 0
            %694 = vmatpush1.bf16.msra.mxu0 %v678
            %695 = vmatprep.subr.bf16.mxu0 0
            %696 = vmatpush1.bf16.msra.mxu0 %v677
            %697 = vmatprep.subr.bf16.mxu0 0
            %698 = vmatpush2.bf16.msra.mxu0 0
            %699 = vmatprep.subr.bf16.mxu0 0
            %700 = vmatpush2.bf16.msra.mxu0 0
            %701 = vmatprep.subr.bf16.mxu0 0
            %702 = vmatpush2.bf16.msra.mxu0 0
            %703 = vmatprep.subr.bf16.mxu0 0
            %704 = vmatpush2.bf16.msra.mxu0 0
            %705 = vmatprep.subr.bf16.mxu0 0
            %706 = vmatpush2.bf16.msra.mxu0 0
            %707 = vmatprep.subr.bf16.mxu0 0
            %708 = vmatpush2.bf16.msra.mxu0 0
            %709 = vmatprep.subr.bf16.mxu0 0
            %710 = vmatpush2.bf16.msra.mxu0 0
            %711 = vmatprep.subr.bf16.mxu0 0
            %712 = vmatpush2.bf16.msra.mxu0 0
            %713 = vmatprep.mubr.bf16.mxu0 0
            %714 = vmatmul.mubr.bf16.gmra.mxu0 %v541
            %v715 = vpop.f32.mrf.mxu0
            %v716 = vadd.f32 0.0, %v715
            %v717 = vpop.f32.mrf.mxu0
            %v718 = vpop.f32.mrf.mxu0
            %v719 = vpop.f32.mrf.mxu0
            %720 = vdwg.mxu0
            %v721 = vmul.f32 %v716, %v521
            %v723 = vsel %vm584, %v716, 0
            %725 = vmatprep.subr.mxu0 0.0
            %726 = vmatpush1.msra.mxu0 0.0
            %727 = vmatprep.subr.mxu0 0.0
            %728 = vmatpush1.msra.mxu0 0.0
            %729 = vmatprep.subr.mxu0 0.0
            %730 = vmatpush1.msra.mxu0 0.0
            %731 = vmatprep.subr.mxu0 0.0
            %732 = vmatpush1.msra.mxu0 0.0
            %733 = vmatprep.subr.mxu0 0.0
            %734 = vmatpush1.msra.mxu0 0.0
            %735 = vmatprep.subr.mxu0 0.0
            %736 = vmatpush1.msra.mxu0 0.0
            %737 = vmatprep.subr.mxu0 0.0
            %738 = vmatpush1.msra.mxu0 0.0
            %739 = vmatprep.subr.mxu0 0.0
            %740 = vmatpush1.msra.mxu0 0.0
            %741 = vmatprep.subr.mxu0 0.0
            %742 = vmatpush1.msra.mxu0 0.0
            %743 = vmatprep.subr.mxu0 0.0
            %744 = vmatpush1.msra.mxu0 0.0
            %745 = vmatprep.subr.mxu0 0.0
            %746 = vmatpush1.msra.mxu0 0.0
            %747 = vmatprep.subr.mxu0 0.0
            %748 = vmatpush1.msra.mxu0 0.0
            %749 = vmatprep.subr.mxu0 0.0
            %750 = vmatpush1.msra.mxu0 0.0
            %751 = vmatprep.subr.mxu0 0.0
            %752 = vmatpush1.msra.mxu0 0.0
            %753 = vmatprep.subr.mxu0 0.0
            %754 = vmatpush1.msra.mxu0 0.0
            %755 = vmatprep.subr.mxu0 0.0
            %756 = vmatpush1.msra.mxu0 %v515
            %757 = vmatprep.subr.mxu0 0.0
            %758 = vmatpush2.msra.mxu0 0.0
            %759 = vmatprep.subr.mxu0 0.0
            %760 = vmatpush2.msra.mxu0 0.0
            %761 = vmatprep.subr.mxu0 0.0
            %762 = vmatpush2.msra.mxu0 0.0
            %763 = vmatprep.subr.mxu0 0.0
            %764 = vmatpush2.msra.mxu0 0.0
            %765 = vmatprep.subr.mxu0 0.0
            %766 = vmatpush2.msra.mxu0 0.0
            %767 = vmatprep.subr.mxu0 0.0
            %768 = vmatpush2.msra.mxu0 0.0
            %769 = vmatprep.subr.mxu0 0.0
            %770 = vmatpush2.msra.mxu0 0.0
            %771 = vmatprep.subr.mxu0 0.0
            %772 = vmatpush2.msra.mxu0 0.0
            %773 = vmatprep.subr.mxu0 0.0
            %774 = vmatpush2.msra.mxu0 0.0
            %775 = vmatprep.subr.mxu0 0.0
            %776 = vmatpush2.msra.mxu0 0.0
            %777 = vmatprep.subr.mxu0 0.0
            %778 = vmatpush2.msra.mxu0 0.0
            %779 = vmatprep.subr.mxu0 0.0
            %780 = vmatpush2.msra.mxu0 0.0
            %781 = vmatprep.subr.mxu0 0.0
            %782 = vmatpush2.msra.mxu0 0.0
            %783 = vmatprep.subr.mxu0 0.0
            %784 = vmatpush2.msra.mxu0 0.0
            %785 = vmatprep.subr.mxu0 0.0
            %786 = vmatpush2.msra.mxu0 0.0
            %787 = vmatprep.subr.mxu0 0.0
            %788 = vmatpush2.msra.mxu0 0.0
            %789 = vmatprep.mubr.f32.mxu0 0.0
            %790 = vmatmul.mubr.f32.gmra.mxu0 %v723
            %v791 = vpop.f32.mrf.mxu0
            %v792 = vadd.f32 0.0, %v791
            %v793 = vpop.f32.mrf.mxu0
            %794 = vdwg.mxu0
            %v795 = vmul.f32 %v792, %v522
            %v796 = vadd.f32 %v721, %v795
            %v797 = vmul.f32 %v796, 0.35355338
            %v798 = vpack.c.bf16 %v797, %v797
            %799 = vst.msk [vmem:[#allocation2 + $0x4] sm:$0xf] %vm662, %v798
            %s800 = scalar_lea.vmem %s2, 32
            %v801 = vld [vmem:[%s800] sm:$0xf]
            %v802 = vld [vmem:[%s800 + $0x4] sm:$0xf]
            %v803 = vld [vmem:[%s800 + $0x8] sm:$0xf]
            %v804 = vld [vmem:[%s800 + $0xc] sm:$0xf]
            %v809 = vunpack.c.l.b16 %v801
            %v810 = vunpack.c.l.b16 %v802
            %v811 = vunpack.c.l.b16 %v803
            %v812 = vunpack.c.l.b16 %v804
            %v813 = vpack.c.b16 %v810, %v809
            %v814 = vpack.c.b16 %v812, %v811
            %817 = vmatprep.subr.bf16.mxu0 0
            %818 = vmatpush1.bf16.msra.mxu0 0
            %819 = vmatprep.subr.bf16.mxu0 0
            %820 = vmatpush1.bf16.msra.mxu0 0
            %821 = vmatprep.subr.bf16.mxu0 0
            %822 = vmatpush1.bf16.msra.mxu0 0
            %823 = vmatprep.subr.bf16.mxu0 0
            %824 = vmatpush1.bf16.msra.mxu0 0
            %825 = vmatprep.subr.bf16.mxu0 0
            %826 = vmatpush1.bf16.msra.mxu0 0
            %827 = vmatprep.subr.bf16.mxu0 0
            %828 = vmatpush1.bf16.msra.mxu0 0
            %829 = vmatprep.subr.bf16.mxu0 0
            %830 = vmatpush1.bf16.msra.mxu0 %v814
            %831 = vmatprep.subr.bf16.mxu0 0
            %832 = vmatpush1.bf16.msra.mxu0 %v813
            %833 = vmatprep.subr.bf16.mxu0 0
            %834 = vmatpush2.bf16.msra.mxu0 0
            %835 = vmatprep.subr.bf16.mxu0 0
            %836 = vmatpush2.bf16.msra.mxu0 0
            %837 = vmatprep.subr.bf16.mxu0 0
            %838 = vmatpush2.bf16.msra.mxu0 0
            %839 = vmatprep.subr.bf16.mxu0 0
            %840 = vmatpush2.bf16.msra.mxu0 0
            %841 = vmatprep.subr.bf16.mxu0 0
            %842 = vmatpush2.bf16.msra.mxu0 0
            %843 = vmatprep.subr.bf16.mxu0 0
            %844 = vmatpush2.bf16.msra.mxu0 0
            %845 = vmatprep.subr.bf16.mxu0 0
            %846 = vmatpush2.bf16.msra.mxu0 0
            %847 = vmatprep.subr.bf16.mxu0 0
            %848 = vmatpush2.bf16.msra.mxu0 0
            %849 = vmatprep.mubr.bf16.mxu0 0
            %850 = vmatmul.mubr.bf16.gmra.mxu0 %v541
            %v851 = vpop.f32.mrf.mxu0
            %v852 = vadd.f32 0.0, %v851
            %v853 = vpop.f32.mrf.mxu0
            %v854 = vpop.f32.mrf.mxu0
            %v855 = vpop.f32.mrf.mxu0
            %856 = vdwg.mxu0
            %v857 = vmul.f32 %v852, %v521
            %v859 = vsel %vm584, %v852, 0
            %861 = vmatprep.subr.mxu0 0.0
            %862 = vmatpush1.msra.mxu0 0.0
            %863 = vmatprep.subr.mxu0 0.0
            %864 = vmatpush1.msra.mxu0 0.0
            %865 = vmatprep.subr.mxu0 0.0
            %866 = vmatpush1.msra.mxu0 0.0
            %867 = vmatprep.subr.mxu0 0.0
            %868 = vmatpush1.msra.mxu0 0.0
            %869 = vmatprep.subr.mxu0 0.0
            %870 = vmatpush1.msra.mxu0 0.0
            %871 = vmatprep.subr.mxu0 0.0
            %872 = vmatpush1.msra.mxu0 0.0
            %873 = vmatprep.subr.mxu0 0.0
            %874 = vmatpush1.msra.mxu0 0.0
            %875 = vmatprep.subr.mxu0 0.0
            %876 = vmatpush1.msra.mxu0 0.0
            %877 = vmatprep.subr.mxu0 0.0
            %878 = vmatpush1.msra.mxu0 0.0
            %879 = vmatprep.subr.mxu0 0.0
            %880 = vmatpush1.msra.mxu0 0.0
            %881 = vmatprep.subr.mxu0 0.0
            %882 = vmatpush1.msra.mxu0 0.0
            %883 = vmatprep.subr.mxu0 0.0
            %884 = vmatpush1.msra.mxu0 0.0
            %885 = vmatprep.subr.mxu0 0.0
            %886 = vmatpush1.msra.mxu0 0.0
            %887 = vmatprep.subr.mxu0 0.0
            %888 = vmatpush1.msra.mxu0 0.0
            %889 = vmatprep.subr.mxu0 0.0
            %890 = vmatpush1.msra.mxu0 0.0
            %891 = vmatprep.subr.mxu0 0.0
            %892 = vmatpush1.msra.mxu0 %v515
            %893 = vmatprep.subr.mxu0 0.0
            %894 = vmatpush2.msra.mxu0 0.0
            %895 = vmatprep.subr.mxu0 0.0
            %896 = vmatpush2.msra.mxu0 0.0
            %897 = vmatprep.subr.mxu0 0.0
            %898 = vmatpush2.msra.mxu0 0.0
            %899 = vmatprep.subr.mxu0 0.0
            %900 = vmatpush2.msra.mxu0 0.0
            %901 = vmatprep.subr.mxu0 0.0
            %902 = vmatpush2.msra.mxu0 0.0
            %903 = vmatprep.subr.mxu0 0.0
            %904 = vmatpush2.msra.mxu0 0.0
            %905 = vmatprep.subr.mxu0 0.0
            %906 = vmatpush2.msra.mxu0 0.0
            %907 = vmatprep.subr.mxu0 0.0
            %908 = vmatpush2.msra.mxu0 0.0
            %909 = vmatprep.subr.mxu0 0.0
            %910 = vmatpush2.msra.mxu0 0.0
            %911 = vmatprep.subr.mxu0 0.0
            %912 = vmatpush2.msra.mxu0 0.0
            %913 = vmatprep.subr.mxu0 0.0
            %914 = vmatpush2.msra.mxu0 0.0
            %915 = vmatprep.subr.mxu0 0.0
            %916 = vmatpush2.msra.mxu0 0.0
            %917 = vmatprep.subr.mxu0 0.0
            %918 = vmatpush2.msra.mxu0 0.0
            %919 = vmatprep.subr.mxu0 0.0
            %920 = vmatpush2.msra.mxu0 0.0
            %921 = vmatprep.subr.mxu0 0.0
            %922 = vmatpush2.msra.mxu0 0.0
            %923 = vmatprep.subr.mxu0 0.0
            %924 = vmatpush2.msra.mxu0 0.0
            %925 = vmatprep.mubr.f32.mxu0 0.0
            %926 = vmatmul.mubr.f32.gmra.mxu0 %v859
            %v927 = vpop.f32.mrf.mxu0
            %v928 = vadd.f32 0.0, %v927
            %v929 = vpop.f32.mrf.mxu0
            %930 = vdwg.mxu0
            %v931 = vmul.f32 %v928, %v522
            %v932 = vadd.f32 %v857, %v931
            %v933 = vmul.f32 %v932, 0.35355338
            %v934 = vpack.c.bf16 %v933, %v933
            %s935 = scalar_lea.vmem [#allocation2], 8
            %936 = vst.msk [vmem:[%s935] sm:$0xf] %vm662, %v934
            %s937 = scalar_lea.vmem %s2, 48
            %v938 = vld [vmem:[%s937] sm:$0xf]
            %v939 = vld [vmem:[%s937 + $0x4] sm:$0xf]
            %v940 = vld [vmem:[%s937 + $0x8] sm:$0xf]
            %v941 = vld [vmem:[%s937 + $0xc] sm:$0xf]
            %v946 = vunpack.c.l.b16 %v938
            %v947 = vunpack.c.l.b16 %v939
            %v948 = vunpack.c.l.b16 %v940
            %v949 = vunpack.c.l.b16 %v941
            %v950 = vpack.c.b16 %v947, %v946
            %v951 = vpack.c.b16 %v949, %v948
            %954 = vmatprep.subr.bf16.mxu0 0
            %955 = vmatpush1.bf16.msra.mxu0 0
            %956 = vmatprep.subr.bf16.mxu0 0
            %957 = vmatpush1.bf16.msra.mxu0 0
            %958 = vmatprep.subr.bf16.mxu0 0
            %959 = vmatpush1.bf16.msra.mxu0 0
            %960 = vmatprep.subr.bf16.mxu0 0
            %961 = vmatpush1.bf16.msra.mxu0 0
            %962 = vmatprep.subr.bf16.mxu0 0
            %963 = vmatpush1.bf16.msra.mxu0 0
            %964 = vmatprep.subr.bf16.mxu0 0
            %965 = vmatpush1.bf16.msra.mxu0 0
            %966 = vmatprep.subr.bf16.mxu0 0
            %967 = vmatpush1.bf16.msra.mxu0 %v951
            %968 = vmatprep.subr.bf16.mxu0 0
            %969 = vmatpush1.bf16.msra.mxu0 %v950
            %970 = vmatprep.subr.bf16.mxu0 0
            %971 = vmatpush2.bf16.msra.mxu0 0
            %972 = vmatprep.subr.bf16.mxu0 0
            %973 = vmatpush2.bf16.msra.mxu0 0
            %974 = vmatprep.subr.bf16.mxu0 0
            %975 = vmatpush2.bf16.msra.mxu0 0
            %976 = vmatprep.subr.bf16.mxu0 0
            %977 = vmatpush2.bf16.msra.mxu0 0
            %978 = vmatprep.subr.bf16.mxu0 0
            %979 = vmatpush2.bf16.msra.mxu0 0
            %980 = vmatprep.subr.bf16.mxu0 0
            %981 = vmatpush2.bf16.msra.mxu0 0
            %982 = vmatprep.subr.bf16.mxu0 0
            %983 = vmatpush2.bf16.msra.mxu0 0
            %984 = vmatprep.subr.bf16.mxu0 0
            %985 = vmatpush2.bf16.msra.mxu0 0
            %986 = vmatprep.mubr.bf16.mxu0 0
            %987 = vmatmul.mubr.bf16.gmra.mxu0 %v541
            %v988 = vpop.f32.mrf.mxu0
            %v989 = vadd.f32 0.0, %v988
            %v990 = vpop.f32.mrf.mxu0
            %v991 = vpop.f32.mrf.mxu0
            %v992 = vpop.f32.mrf.mxu0
            %993 = vdwg.mxu0
            %v994 = vmul.f32 %v989, %v521
            %v996 = vsel %vm584, %v989, 0
            %998 = vmatprep.subr.mxu0 0.0
            %999 = vmatpush1.msra.mxu0 0.0
            %1000 = vmatprep.subr.mxu0 0.0
            %1001 = vmatpush1.msra.mxu0 0.0
            %1002 = vmatprep.subr.mxu0 0.0
            %1003 = vmatpush1.msra.mxu0 0.0
            %1004 = vmatprep.subr.mxu0 0.0
            %1005 = vmatpush1.msra.mxu0 0.0
            %1006 = vmatprep.subr.mxu0 0.0
            %1007 = vmatpush1.msra.mxu0 0.0
            %1008 = vmatprep.subr.mxu0 0.0
            %1009 = vmatpush1.msra.mxu0 0.0
            %1010 = vmatprep.subr.mxu0 0.0
            %1011 = vmatpush1.msra.mxu0 0.0
            %1012 = vmatprep.subr.mxu0 0.0
            %1013 = vmatpush1.msra.mxu0 0.0
            %1014 = vmatprep.subr.mxu0 0.0
            %1015 = vmatpush1.msra.mxu0 0.0
            %1016 = vmatprep.subr.mxu0 0.0
            %1017 = vmatpush1.msra.mxu0 0.0
            %1018 = vmatprep.subr.mxu0 0.0
            %1019 = vmatpush1.msra.mxu0 0.0
            %1020 = vmatprep.subr.mxu0 0.0
            %1021 = vmatpush1.msra.mxu0 0.0
            %1022 = vmatprep.subr.mxu0 0.0
            %1023 = vmatpush1.msra.mxu0 0.0
            %1024 = vmatprep.subr.mxu0 0.0
            %1025 = vmatpush1.msra.mxu0 0.0
            %1026 = vmatprep.subr.mxu0 0.0
            %1027 = vmatpush1.msra.mxu0 0.0
            %1028 = vmatprep.subr.mxu0 0.0
            %1029 = vmatpush1.msra.mxu0 %v515
            %1030 = vmatprep.subr.mxu0 0.0
            %1031 = vmatpush2.msra.mxu0 0.0
            %1032 = vmatprep.subr.mxu0 0.0
            %1033 = vmatpush2.msra.mxu0 0.0
            %1034 = vmatprep.subr.mxu0 0.0
            %1035 = vmatpush2.msra.mxu0 0.0
            %1036 = vmatprep.subr.mxu0 0.0
            %1037 = vmatpush2.msra.mxu0 0.0
            %1038 = vmatprep.subr.mxu0 0.0
            %1039 = vmatpush2.msra.mxu0 0.0
            %1040 = vmatprep.subr.mxu0 0.0
            %1041 = vmatpush2.msra.mxu0 0.0
            %1042 = vmatprep.subr.mxu0 0.0
            %1043 = vmatpush2.msra.mxu0 0.0
            %1044 = vmatprep.subr.mxu0 0.0
            %1045 = vmatpush2.msra.mxu0 0.0
            %1046 = vmatprep.subr.mxu0 0.0
            %1047 = vmatpush2.msra.mxu0 0.0
            %1048 = vmatprep.subr.mxu0 0.0
            %1049 = vmatpush2.msra.mxu0 0.0
            %1050 = vmatprep.subr.mxu0 0.0
            %1051 = vmatpush2.msra.mxu0 0.0
            %1052 = vmatprep.subr.mxu0 0.0
            %1053 = vmatpush2.msra.mxu0 0.0
            %1054 = vmatprep.subr.mxu0 0.0
            %1055 = vmatpush2.msra.mxu0 0.0
            %1056 = vmatprep.subr.mxu0 0.0
            %1057 = vmatpush2.msra.mxu0 0.0
            %1058 = vmatprep.subr.mxu0 0.0
            %1059 = vmatpush2.msra.mxu0 0.0
            %1060 = vmatprep.subr.mxu0 0.0
            %1061 = vmatpush2.msra.mxu0 0.0
            %1062 = vmatprep.mubr.f32.mxu0 0.0
            %1063 = vmatmul.mubr.f32.gmra.mxu0 %v996
            %v1064 = vpop.f32.mrf.mxu0
            %v1065 = vadd.f32 0.0, %v1064
            %v1066 = vpop.f32.mrf.mxu0
            %1067 = vdwg.mxu0
            %v1068 = vmul.f32 %v1065, %v522
            %v1069 = vadd.f32 %v994, %v1068
            %v1070 = vmul.f32 %v1069, 0.35355338
            %v1071 = vpack.c.bf16 %v1070, %v1070
            %1072 = vst.msk [vmem:[%s935 + $0x4] sm:$0xf] %vm662, %v1071
            %vm1073 = vcmask 7168
            %1074 = vst.msk [vmem:[#allocation5] sm:$0xff] %vm1073, -1e+30
            %1075 = vst.msk [vmem:[#allocation5 + $0x8] sm:$0xff] %vm1073, -1e+30
            %1076 = vst.msk [vmem:[#allocation5 + $0x10] sm:$0xff] %vm1073, -1e+30
            %1077 = vst.msk [vmem:[#allocation5 + $0x18] sm:$0xff] %vm1073, -1e+30
            %1078 = vst.msk [vmem:[#allocation6] sm:$0xff] %vm1073, 0.0
            %1079 = vst.msk [vmem:[#allocation6 + $0x8] sm:$0xff] %vm1073, 0.0
            %1080 = vst.msk [vmem:[#allocation6 + $0x10] sm:$0xff] %vm1073, 0.0
            %1081 = vst.msk [vmem:[#allocation6 + $0x18] sm:$0xff] %vm1073, 0.0
            %1082 = vst.msk [vmem:[#allocation7] sm:$0xff] %vm584, 0.0
            %1083 = vst.msk [vmem:[#allocation7 + $0x8] sm:$0xff] %vm584, 0.0
            %1084 = vst.msk [vmem:[#allocation7 + $0x10] sm:$0xff] %vm584, 0.0
            %1085 = vst.msk [vmem:[#allocation7 + $0x18] sm:$0xff] %vm584, 0.0
          $region72: #{tpu_custom_call.1} parent=67 // pred_fallthru
            _
          %v1086 = vld [vmem:[%s493] sm:$0xf]
          %v1087 = vld [vmem:[%s505] sm:$0xff]
          %v1088 = vld [vmem:[%s509] sm:$0xff]
          %v1089 = vld [vmem:[%s3] sm:$0xf]
          %v1090 = vld [vmem:[%s3 + $0x4] sm:$0xf]
          %v1091 = vld [vmem:[%s3 + $0x8] sm:$0xf]
          %v1092 = vld [vmem:[%s3 + $0xc] sm:$0xf]
          %v1097 = vunpack.c.l.b16 %v1089
          %v1098 = vunpack.c.l.b16 %v1090
          %v1099 = vunpack.c.l.b16 %v1091
          %v1100 = vunpack.c.l.b16 %v1092
          %v1101 = vpack.c.b16 %v1098, %v1097
          %v1102 = vpack.c.b16 %v1100, %v1099
          %vm1105 = vcmask 261120
          %v1107 = vsel %vm1105, %v1086, 0
          %1109 = vmatprep.subr.bf16.mxu0 0
          %1110 = vmatpush1.bf16.msra.mxu0 0
          %1111 = vmatprep.subr.bf16.mxu0 0
          %1112 = vmatpush1.bf16.msra.mxu0 0
          %1113 = vmatprep.subr.bf16.mxu0 0
          %1114 = vmatpush1.bf16.msra.mxu0 0
          %1115 = vmatprep.subr.bf16.mxu0 0
          %1116 = vmatpush1.bf16.msra.mxu0 0
          %1117 = vmatprep.subr.bf16.mxu0 0
          %1118 = vmatpush1.bf16.msra.mxu0 0
          %1119 = vmatprep.subr.bf16.mxu0 0
          %1120 = vmatpush1.bf16.msra.mxu0 0
          %1121 = vmatprep.subr.bf16.mxu0 0
          %1122 = vmatpush1.bf16.msra.mxu0 %v1102
          %1123 = vmatprep.subr.bf16.mxu0 0
          %1124 = vmatpush1.bf16.msra.mxu0 %v1101
          %1125 = vmatprep.subr.bf16.mxu0 0
          %1126 = vmatpush2.bf16.msra.mxu0 0
          %1127 = vmatprep.subr.bf16.mxu0 0
          %1128 = vmatpush2.bf16.msra.mxu0 0
          %1129 = vmatprep.subr.bf16.mxu0 0
          %1130 = vmatpush2.bf16.msra.mxu0 0
          %1131 = vmatprep.subr.bf16.mxu0 0
          %1132 = vmatpush2.bf16.msra.mxu0 0
          %1133 = vmatprep.subr.bf16.mxu0 0
          %1134 = vmatpush2.bf16.msra.mxu0 0
          %1135 = vmatprep.subr.bf16.mxu0 0
          %1136 = vmatpush2.bf16.msra.mxu0 0
          %1137 = vmatprep.subr.bf16.mxu0 0
          %1138 = vmatpush2.bf16.msra.mxu0 0
          %1139 = vmatprep.subr.bf16.mxu0 0
          %1140 = vmatpush2.bf16.msra.mxu0 0
          %1141 = vmatprep.mubr.bf16.mxu0 0
          %1142 = vmatmul.mubr.bf16.gmra.mxu0 %v1107
          %v1143 = vpop.f32.mrf.mxu0
          %v1144 = vadd.f32 0.0, %v1143
          %v1145 = vpop.f32.mrf.mxu0
          %v1146 = vpop.f32.mrf.mxu0
          %v1147 = vpop.f32.mrf.mxu0
          %1148 = vdwg.mxu0
          %v1149 = vmul.f32 %v1144, %v1087
          %vm1150 = vcmask 64512
          %v1152 = vsel %vm1150, %v1144, 0
          %1154 = vmatprep.subr.mxu0 0.0
          %1155 = vmatpush1.msra.mxu0 0.0
          %1156 = vmatprep.subr.mxu0 0.0
          %1157 = vmatpush1.msra.mxu0 0.0
          %1158 = vmatprep.subr.mxu0 0.0
          %1159 = vmatpush1.msra.mxu0 0.0
          %1160 = vmatprep.subr.mxu0 0.0
          %1161 = vmatpush1.msra.mxu0 0.0
          %1162 = vmatprep.subr.mxu0 0.0
          %1163 = vmatpush1.msra.mxu0 0.0
          %1164 = vmatprep.subr.mxu0 0.0
          %1165 = vmatpush1.msra.mxu0 0.0
          %1166 = vmatprep.subr.mxu0 0.0
          %1167 = vmatpush1.msra.mxu0 0.0
          %1168 = vmatprep.subr.mxu0 0.0
          %1169 = vmatpush1.msra.mxu0 0.0
          %1170 = vmatprep.subr.mxu0 0.0
          %1171 = vmatpush1.msra.mxu0 0.0
          %1172 = vmatprep.subr.mxu0 0.0
          %1173 = vmatpush1.msra.mxu0 0.0
          %1174 = vmatprep.subr.mxu0 0.0
          %1175 = vmatpush1.msra.mxu0 0.0
          %1176 = vmatprep.subr.mxu0 0.0
          %1177 = vmatpush1.msra.mxu0 0.0
          %1178 = vmatprep.subr.mxu0 0.0
          %1179 = vmatpush1.msra.mxu0 0.0
          %1180 = vmatprep.subr.mxu0 0.0
          %1181 = vmatpush1.msra.mxu0 0.0
          %1182 = vmatprep.subr.mxu0 0.0
          %1183 = vmatpush1.msra.mxu0 0.0
          %1184 = vmatprep.subr.mxu0 0.0
          %1185 = vmatpush1.msra.mxu0 %v515
          %1186 = vmatprep.subr.mxu0 0.0
          %1187 = vmatpush2.msra.mxu0 0.0
          %1188 = vmatprep.subr.mxu0 0.0
          %1189 = vmatpush2.msra.mxu0 0.0
          %1190 = vmatprep.subr.mxu0 0.0
          %1191 = vmatpush2.msra.mxu0 0.0
          %1192 = vmatprep.subr.mxu0 0.0
          %1193 = vmatpush2.msra.mxu0 0.0
          %1194 = vmatprep.subr.mxu0 0.0
          %1195 = vmatpush2.msra.mxu0 0.0
          %1196 = vmatprep.subr.mxu0 0.0
          %1197 = vmatpush2.msra.mxu0 0.0
          %1198 = vmatprep.subr.mxu0 0.0
          %1199 = vmatpush2.msra.mxu0 0.0
          %1200 = vmatprep.subr.mxu0 0.0
          %1201 = vmatpush2.msra.mxu0 0.0
          %1202 = vmatprep.subr.mxu0 0.0
          %1203 = vmatpush2.msra.mxu0 0.0
          %1204 = vmatprep.subr.mxu0 0.0
          %1205 = vmatpush2.msra.mxu0 0.0
          %1206 = vmatprep.subr.mxu0 0.0
          %1207 = vmatpush2.msra.mxu0 0.0
          %1208 = vmatprep.subr.mxu0 0.0
          %1209 = vmatpush2.msra.mxu0 0.0
          %1210 = vmatprep.subr.mxu0 0.0
          %1211 = vmatpush2.msra.mxu0 0.0
          %1212 = vmatprep.subr.mxu0 0.0
          %1213 = vmatpush2.msra.mxu0 0.0
          %1214 = vmatprep.subr.mxu0 0.0
          %1215 = vmatpush2.msra.mxu0 0.0
          %1216 = vmatprep.subr.mxu0 0.0
          %1217 = vmatpush2.msra.mxu0 0.0
          %1218 = vmatprep.mubr.f32.mxu0 0.0
          %1219 = vmatmul.mubr.f32.gmra.mxu0 %v1152
          %v1220 = vpop.f32.mrf.mxu0
          %v1221 = vadd.f32 0.0, %v1220
          %v1222 = vpop.f32.mrf.mxu0
          %1223 = vdwg.mxu0
          %v1224 = vmul.f32 %v1221, %v1088
          %v1225 = vadd.f32 %v1149, %v1224
          %v1226 = vpack.c.bf16 %v1225, %v1225
          %vm1227 = vcmask 60416
          %1228 = vst.msk [vmem:[#allocation3] sm:$0xf] %vm1227, %v1226
          %v1229 = vld [vmem:[%s4] sm:$0xf]
          %v1230 = vld [vmem:[%s4 + $0x4] sm:$0xf]
          %v1231 = vld [vmem:[%s4 + $0x8] sm:$0xf]
          %v1232 = vld [vmem:[%s4 + $0xc] sm:$0xf]
          %v1237 = vunpack.c.l.b16 %v1229
          %v1238 = vunpack.c.l.b16 %v1230
          %v1239 = vunpack.c.l.b16 %v1231
          %v1240 = vunpack.c.l.b16 %v1232
          %v1241 = vpack.c.b16 %v1238, %v1237
          %v1242 = vpack.c.b16 %v1240, %v1239
          %1245 = vmatprep.subr.bf16.mxu0 0
          %1246 = vmatpush1.bf16.msra.mxu0 0
          %1247 = vmatprep.subr.bf16.mxu0 0
          %1248 = vmatpush1.bf16.msra.mxu0 0
          %1249 = vmatprep.subr.bf16.mxu0 0
          %1250 = vmatpush1.bf16.msra.mxu0 0
          %1251 = vmatprep.subr.bf16.mxu0 0
          %1252 = vmatpush1.bf16.msra.mxu0 0
          %1253 = vmatprep.subr.bf16.mxu0 0
          %1254 = vmatpush1.bf16.msra.mxu0 0
          %1255 = vmatprep.subr.bf16.mxu0 0
          %1256 = vmatpush1.bf16.msra.mxu0 0
          %1257 = vmatprep.subr.bf16.mxu0 0
          %1258 = vmatpush1.bf16.msra.mxu0 %v1242
          %1259 = vmatprep.subr.bf16.mxu0 0
          %1260 = vmatpush1.bf16.msra.mxu0 %v1241
          %1261 = vmatprep.subr.bf16.mxu0 0
          %1262 = vmatpush2.bf16.msra.mxu0 0
          %1263 = vmatprep.subr.bf16.mxu0 0
          %1264 = vmatpush2.bf16.msra.mxu0 0
          %1265 = vmatprep.subr.bf16.mxu0 0
          %1266 = vmatpush2.bf16.msra.mxu0 0
          %1267 = vmatprep.subr.bf16.mxu0 0
          %1268 = vmatpush2.bf16.msra.mxu0 0
          %1269 = vmatprep.subr.bf16.mxu0 0
          %1270 = vmatpush2.bf16.msra.mxu0 0
          %1271 = vmatprep.subr.bf16.mxu0 0
          %1272 = vmatpush2.bf16.msra.mxu0 0
          %1273 = vmatprep.subr.bf16.mxu0 0
          %1274 = vmatpush2.bf16.msra.mxu0 0
          %1275 = vmatprep.subr.bf16.mxu0 0
          %1276 = vmatpush2.bf16.msra.mxu0 0
          %1277 = vmatprep.mubr.bf16.mxu0 0
          %1278 = vmatmul.mubr.bf16.gmra.mxu0 %v1107
          %v1279 = vpop.f32.mrf.mxu0
          %v1280 = vadd.f32 0.0, %v1279
          %v1281 = vpop.f32.mrf.mxu0
          %v1282 = vpop.f32.mrf.mxu0
          %v1283 = vpop.f32.mrf.mxu0
          %1284 = vdwg.mxu0
          %v1285 = vpack.c.bf16 %v1280, %v1280
          %1286 = vst.msk [vmem:[#allocation4] sm:$0xf] %vm1227, %v1285
          %s1287 = scalar_lea.vmem %s3, 16
          %v1288 = vld [vmem:[%s1287] sm:$0xf]
          %v1289 = vld [vmem:[%s1287 + $0x4] sm:$0xf]
          %v1290 = vld [vmem:[%s1287 + $0x8] sm:$0xf]
          %v1291 = vld [vmem:[%s1287 + $0xc] sm:$0xf]
          %v1296 = vunpack.c.l.b16 %v1288
          %v1297 = vunpack.c.l.b16 %v1289
          %v1298 = vunpack.c.l.b16 %v1290
          %v1299 = vunpack.c.l.b16 %v1291
          %v1300 = vpack.c.b16 %v1297, %v1296
          %v1301 = vpack.c.b16 %v1299, %v1298
          %1304 = vmatprep.subr.bf16.mxu0 0
          %1305 = vmatpush1.bf16.msra.mxu0 0
          %1306 = vmatprep.subr.bf16.mxu0 0
          %1307 = vmatpush1.bf16.msra.mxu0 0
          %1308 = vmatprep.subr.bf16.mxu0 0
          %1309 = vmatpush1.bf16.msra.mxu0 0
          %1310 = vmatprep.subr.bf16.mxu0 0
          %1311 = vmatpush1.bf16.msra.mxu0 0
          %1312 = vmatprep.subr.bf16.mxu0 0
          %1313 = vmatpush1.bf16.msra.mxu0 0
          %1314 = vmatprep.subr.bf16.mxu0 0
          %1315 = vmatpush1.bf16.msra.mxu0 0
          %1316 = vmatprep.subr.bf16.mxu0 0
          %1317 = vmatpush1.bf16.msra.mxu0 %v1301
          %1318 = vmatprep.subr.bf16.mxu0 0
          %1319 = vmatpush1.bf16.msra.mxu0 %v1300
          %1320 = vmatprep.subr.bf16.mxu0 0
          %1321 = vmatpush2.bf16.msra.mxu0 0
          %1322 = vmatprep.subr.bf16.mxu0 0
          %1323 = vmatpush2.bf16.msra.mxu0 0
          %1324 = vmatprep.subr.bf16.mxu0 0
          %1325 = vmatpush2.bf16.msra.mxu0 0
          %1326 = vmatprep.subr.bf16.mxu0 0
          %1327 = vmatpush2.bf16.msra.mxu0 0
          %1328 = vmatprep.subr.bf16.mxu0 0
          %1329 = vmatpush2.bf16.msra.mxu0 0
          %1330 = vmatprep.subr.bf16.mxu0 0
          %1331 = vmatpush2.bf16.msra.mxu0 0
          %1332 = vmatprep.subr.bf16.mxu0 0
          %1333 = vmatpush2.bf16.msra.mxu0 0
          %1334 = vmatprep.subr.bf16.mxu0 0
          %1335 = vmatpush2.bf16.msra.mxu0 0
          %1336 = vmatprep.mubr.bf16.mxu0 0
          %1337 = vmatmul.mubr.bf16.gmra.mxu0 %v1107
          %v1338 = vpop.f32.mrf.mxu0
          %v1339 = vadd.f32 0.0, %v1338
          %v1340 = vpop.f32.mrf.mxu0
          %v1341 = vpop.f32.mrf.mxu0
          %v1342 = vpop.f32.mrf.mxu0
          %1343 = vdwg.mxu0
          %v1344 = vmul.f32 %v1339, %v1087
          %v1346 = vsel %vm1150, %v1339, 0
          %1348 = vmatprep.subr.mxu0 0.0
          %1349 = vmatpush1.msra.mxu0 0.0
          %1350 = vmatprep.subr.mxu0 0.0
          %1351 = vmatpush1.msra.mxu0 0.0
          %1352 = vmatprep.subr.mxu0 0.0
          %1353 = vmatpush1.msra.mxu0 0.0
          %1354 = vmatprep.subr.mxu0 0.0
          %1355 = vmatpush1.msra.mxu0 0.0
          %1356 = vmatprep.subr.mxu0 0.0
          %1357 = vmatpush1.msra.mxu0 0.0
          %1358 = vmatprep.subr.mxu0 0.0
          %1359 = vmatpush1.msra.mxu0 0.0
          %1360 = vmatprep.subr.mxu0 0.0
          %1361 = vmatpush1.msra.mxu0 0.0
          %1362 = vmatprep.subr.mxu0 0.0
          %1363 = vmatpush1.msra.mxu0 0.0
          %1364 = vmatprep.subr.mxu0 0.0
          %1365 = vmatpush1.msra.mxu0 0.0
          %1366 = vmatprep.subr.mxu0 0.0
          %1367 = vmatpush1.msra.mxu0 0.0
          %1368 = vmatprep.subr.mxu0 0.0
          %1369 = vmatpush1.msra.mxu0 0.0
          %1370 = vmatprep.subr.mxu0 0.0
          %1371 = vmatpush1.msra.mxu0 0.0
          %1372 = vmatprep.subr.mxu0 0.0
          %1373 = vmatpush1.msra.mxu0 0.0
          %1374 = vmatprep.subr.mxu0 0.0
          %1375 = vmatpush1.msra.mxu0 0.0
          %1376 = vmatprep.subr.mxu0 0.0
          %1377 = vmatpush1.msra.mxu0 0.0
          %1378 = vmatprep.subr.mxu0 0.0
          %1379 = vmatpush1.msra.mxu0 %v515
          %1380 = vmatprep.subr.mxu0 0.0
          %1381 = vmatpush2.msra.mxu0 0.0
          %1382 = vmatprep.subr.mxu0 0.0
          %1383 = vmatpush2.msra.mxu0 0.0
          %1384 = vmatprep.subr.mxu0 0.0
          %1385 = vmatpush2.msra.mxu0 0.0
          %1386 = vmatprep.subr.mxu0 0.0
          %1387 = vmatpush2.msra.mxu0 0.0
          %1388 = vmatprep.subr.mxu0 0.0
          %1389 = vmatpush2.msra.mxu0 0.0
          %1390 = vmatprep.subr.mxu0 0.0
          %1391 = vmatpush2.msra.mxu0 0.0
          %1392 = vmatprep.subr.mxu0 0.0
          %1393 = vmatpush2.msra.mxu0 0.0
          %1394 = vmatprep.subr.mxu0 0.0
          %1395 = vmatpush2.msra.mxu0 0.0
          %1396 = vmatprep.subr.mxu0 0.0
          %1397 = vmatpush2.msra.mxu0 0.0
          %1398 = vmatprep.subr.mxu0 0.0
          %1399 = vmatpush2.msra.mxu0 0.0
          %1400 = vmatprep.subr.mxu0 0.0
          %1401 = vmatpush2.msra.mxu0 0.0
          %1402 = vmatprep.subr.mxu0 0.0
          %1403 = vmatpush2.msra.mxu0 0.0
          %1404 = vmatprep.subr.mxu0 0.0
          %1405 = vmatpush2.msra.mxu0 0.0
          %1406 = vmatprep.subr.mxu0 0.0
          %1407 = vmatpush2.msra.mxu0 0.0
          %1408 = vmatprep.subr.mxu0 0.0
          %1409 = vmatpush2.msra.mxu0 0.0
          %1410 = vmatprep.subr.mxu0 0.0
          %1411 = vmatpush2.msra.mxu0 0.0
          %1412 = vmatprep.mubr.f32.mxu0 0.0
          %1413 = vmatmul.mubr.f32.gmra.mxu0 %v1346
          %v1414 = vpop.f32.mrf.mxu0
          %v1415 = vadd.f32 0.0, %v1414
          %v1416 = vpop.f32.mrf.mxu0
          %1417 = vdwg.mxu0
          %v1418 = vmul.f32 %v1415, %v1088
          %v1419 = vadd.f32 %v1344, %v1418
          %v1420 = vpack.c.bf16 %v1419, %v1419
          %s1421 = scalar_lea.vmem [#allocation3], 4
          %1422 = vst.msk [vmem:[%s1421] sm:$0xf] %vm1227, %v1420
          %s1423 = scalar_lea.vmem %s4, 16
          %v1424 = vld [vmem:[%s1423] sm:$0xf]
          %v1425 = vld [vmem:[%s1423 + $0x4] sm:$0xf]
          %v1426 = vld [vmem:[%s1423 + $0x8] sm:$0xf]
          %v1427 = vld [vmem:[%s1423 + $0xc] sm:$0xf]
          %v1432 = vunpack.c.l.b16 %v1424
          %v1433 = vunpack.c.l.b16 %v1425
          %v1434 = vunpack.c.l.b16 %v1426
          %v1435 = vunpack.c.l.b16 %v1427
          %v1436 = vpack.c.b16 %v1433, %v1432
          %v1437 = vpack.c.b16 %v1435, %v1434
          %1440 = vmatprep.subr.bf16.mxu0 0
          %1441 = vmatpush1.bf16.msra.mxu0 0
          %1442 = vmatprep.subr.bf16.mxu0 0
          %1443 = vmatpush1.bf16.msra.mxu0 0
          %1444 = vmatprep.subr.bf16.mxu0 0
          %1445 = vmatpush1.bf16.msra.mxu0 0
          %1446 = vmatprep.subr.bf16.mxu0 0
          %1447 = vmatpush1.bf16.msra.mxu0 0
          %1448 = vmatprep.subr.bf16.mxu0 0
          %1449 = vmatpush1.bf16.msra.mxu0 0
          %1450 = vmatprep.subr.bf16.mxu0 0
          %1451 = vmatpush1.bf16.msra.mxu0 0
          %1452 = vmatprep.subr.bf16.mxu0 0
          %1453 = vmatpush1.bf16.msra.mxu0 %v1437
          %1454 = vmatprep.subr.bf16.mxu0 0
          %1455 = vmatpush1.bf16.msra.mxu0 %v1436
          %1456 = vmatprep.subr.bf16.mxu0 0
          %1457 = vmatpush2.bf16.msra.mxu0 0
          %1458 = vmatprep.subr.bf16.mxu0 0
          %1459 = vmatpush2.bf16.msra.mxu0 0
          %1460 = vmatprep.subr.bf16.mxu0 0
          %1461 = vmatpush2.bf16.msra.mxu0 0
          %1462 = vmatprep.subr.bf16.mxu0 0
          %1463 = vmatpush2.bf16.msra.mxu0 0
          %1464 = vmatprep.subr.bf16.mxu0 0
          %1465 = vmatpush2.bf16.msra.mxu0 0
          %1466 = vmatprep.subr.bf16.mxu0 0
          %1467 = vmatpush2.bf16.msra.mxu0 0
          %1468 = vmatprep.subr.bf16.mxu0 0
          %1469 = vmatpush2.bf16.msra.mxu0 0
          %1470 = vmatprep.subr.bf16.mxu0 0
          %1471 = vmatpush2.bf16.msra.mxu0 0
          %1472 = vmatprep.mubr.bf16.mxu0 0
          %1473 = vmatmul.mubr.bf16.gmra.mxu0 %v1107
          %v1474 = vpop.f32.mrf.mxu0
          %v1475 = vadd.f32 0.0, %v1474
          %v1476 = vpop.f32.mrf.mxu0
          %v1477 = vpop.f32.mrf.mxu0
          %v1478 = vpop.f32.mrf.mxu0
          %1479 = vdwg.mxu0
          %v1480 = vpack.c.bf16 %v1475, %v1475
          %s1481 = scalar_lea.vmem [#allocation4], 4
          %1482 = vst.msk [vmem:[%s1481] sm:$0xf] %vm1227, %v1480
          %v1483 = vld [vmem:[#allocation2] sm:$0xf]
          %v1484 = vld [vmem:[#allocation2 + $0x4] sm:$0xf]
          %v1485 = vld [vmem:[#allocation2 + $0x8] sm:$0xf]
          %v1486 = vld [vmem:[#allocation2 + $0xc] sm:$0xf]
          %v1487 = vld [vmem:[#allocation3] sm:$0xf]
          %v1488 = vld [vmem:[#allocation3 + $0x4] sm:$0xf]
          %v1489 = vld [vmem:[#allocation4] sm:$0xf]
          %v1490 = vld [vmem:[#allocation4 + $0x4] sm:$0xf]
          %v1493 = vunpack.c.l.b16 %v1483
          %v1494 = vunpack.c.l.b16 %v1484
          %v1495 = vpack.c.b16 %v1494, %v1493
          %v1497 = vsel %vm1150, %v1495, 0
          %v1500 = vsel %vm1150, %v1487, 0
          %1502 = vmatprep.subr.bf16.mxu0 0
          %1503 = vmatpush1.bf16.xpose.msra.mxu0 0
          %1504 = vmatprep.subr.bf16.mxu0 0
          %1505 = vmatpush1.bf16.xpose.msra.mxu0 0
          %1506 = vmatprep.subr.bf16.mxu0 0
          %1507 = vmatpush1.bf16.xpose.msra.mxu0 0
          %1508 = vmatprep.subr.bf16.mxu0 0
          %1509 = vmatpush1.bf16.xpose.msra.mxu0 0
          %1510 = vmatprep.subr.bf16.mxu0 0
          %1511 = vmatpush1.bf16.xpose.msra.mxu0 0
          %1512 = vmatprep.subr.bf16.mxu0 0
          %1513 = vmatpush1.bf16.xpose.msra.mxu0 0
          %1514 = vmatprep.subr.bf16.mxu0 0
          %1515 = vmatpush1.bf16.xpose.msra.mxu0 0
          %1516 = vmatprep.subr.bf16.mxu0 0
          %1517 = vmatpush1.bf16.xpose.msra.mxu0 %v1500
          %1518 = vmatprep.subr.bf16.mxu0 0
          %1519 = vmatpush2.bf16.xpose.msra.mxu0 0
          %1520 = vmatprep.subr.bf16.mxu0 0
          %1521 = vmatpush2.bf16.xpose.msra.mxu0 0
          %1522 = vmatprep.subr.bf16.mxu0 0
          %1523 = vmatpush2.bf16.xpose.msra.mxu0 0
          %1524 = vmatprep.subr.bf16.mxu0 0
          %1525 = vmatpush2.bf16.xpose.msra.mxu0 0
          %1526 = vmatprep.subr.bf16.mxu0 0
          %1527 = vmatpush2.bf16.xpose.msra.mxu0 0
          %1528 = vmatprep.subr.bf16.mxu0 0
          %1529 = vmatpush2.bf16.xpose.msra.mxu0 0
          %1530 = vmatprep.subr.bf16.mxu0 0
          %1531 = vmatpush2.bf16.xpose.msra.mxu0 0
          %1532 = vmatprep.subr.bf16.mxu0 0
          %1533 = vmatpush2.bf16.xpose.msra.mxu0 0
          %1534 = vmatprep.mubr.bf16.mxu0 0
          %1535 = vmatmul.mubr.bf16.gmra.mxu0 %v1497
          %v1536 = vpop.f32.mrf.mxu0
          %v1537 = vadd.f32 0.0, %v1536
          %v1538 = vpop.f32.mrf.mxu0
          %v1539 = vpop.f32.mrf.mxu0
          %v1540 = vadd.f32 0.0, %v1539
          %v1541 = vpop.f32.mrf.mxu0
          %1542 = vdwg.mxu0
          %v1545 = vunpack.c.l.b16 %v1485
          %v1546 = vunpack.c.l.b16 %v1486
          %v1547 = vpack.c.b16 %v1546, %v1545
          %v1549 = vsel %vm1150, %v1547, 0
          %v1552 = vsel %vm1150, %v1488, 0
          %1554 = vmatprep.subr.bf16.mxu0 0
          %1555 = vmatpush1.bf16.xpose.msra.mxu0 0
          %1556 = vmatprep.subr.bf16.mxu0 0
          %1557 = vmatpush1.bf16.xpose.msra.mxu0 0
          %1558 = vmatprep.subr.bf16.mxu0 0
          %1559 = vmatpush1.bf16.xpose.msra.mxu0 0
          %1560 = vmatprep.subr.bf16.mxu0 0
          %1561 = vmatpush1.bf16.xpose.msra.mxu0 0
          %1562 = vmatprep.subr.bf16.mxu0 0
          %1563 = vmatpush1.bf16.xpose.msra.mxu0 0
          %1564 = vmatprep.subr.bf16.mxu0 0
          %1565 = vmatpush1.bf16.xpose.msra.mxu0 0
          %1566 = vmatprep.subr.bf16.mxu0 0
          %1567 = vmatpush1.bf16.xpose.msra.mxu0 0
          %1568 = vmatprep.subr.bf16.mxu0 0
          %1569 = vmatpush1.bf16.xpose.msra.mxu0 %v1552
          %1570 = vmatprep.subr.bf16.mxu0 0
          %1571 = vmatpush2.bf16.xpose.msra.mxu0 0
          %1572 = vmatprep.subr.bf16.mxu0 0
          %1573 = vmatpush2.bf16.xpose.msra.mxu0 0
          %1574 = vmatprep.subr.bf16.mxu0 0
          %1575 = vmatpush2.bf16.xpose.msra.mxu0 0
          %1576 = vmatprep.subr.bf16.mxu0 0
          %1577 = vmatpush2.bf16.xpose.msra.mxu0 0
          %1578 = vmatprep.subr.bf16.mxu0 0
          %1579 = vmatpush2.bf16.xpose.msra.mxu0 0
          %1580 = vmatprep.subr.bf16.mxu0 0
          %1581 = vmatpush2.bf16.xpose.msra.mxu0 0
          %1582 = vmatprep.subr.bf16.mxu0 0
          %1583 = vmatpush2.bf16.xpose.msra.mxu0 0
          %1584 = vmatprep.subr.bf16.mxu0 0
          %1585 = vmatpush2.bf16.xpose.msra.mxu0 0
          %1586 = vmatprep.mubr.bf16.mxu0 0
          %1587 = vmatmul.mubr.bf16.gmra.mxu0 %v1549
          %v1588 = vpop.f32.mrf.mxu0
          %v1589 = vadd.f32 0.0, %v1588
          %v1590 = vpop.f32.mrf.mxu0
          %v1591 = vpop.f32.mrf.mxu0
          %v1592 = vadd.f32 0.0, %v1591
          %v1593 = vpop.f32.mrf.mxu0
          %1594 = vdwg.mxu0
          %s1595 = smul.u32 %s31, 8
          %v1596 = vlaneseq
          %v1597 = vshrl.u32 %v1596, 7
          %v1598 = vadd.s32 %v1597, 8
          %vm1599 = vcmp.lt.s32.totalorder %v1597, 0
          %v1600 = vsub.s32 0, %v1597
          %v1601 = vsel %vm1599, %v1600, %v1597
          %v1602 = vshrl.u32 %v1601, 3
          %v1603 = vand.u32 %v1601, 7
          %v1604 = vsub.s32 0, %v1603
          %v1605 = vsel %vm1599, %v1604, %v1603
          %vm1606 = vcmp.lt.s32.totalorder %v1598, 0
          %v1607 = vsub.s32 0, %v1598
          %v1608 = vsel %vm1606, %v1607, %v1598
          %v1609 = vshrl.u32 %v1608, 3
          %v1610 = vand.u32 %v1608, 7
          %v1611 = vsub.s32 0, %v1610
          %v1612 = vsel %vm1606, %v1611, %v1610
          %vm1613 = vcmp.ne.s32.totalorder %v1605, 0
          %vm1614 = vcmp.ne.s32.totalorder %v1612, 0
          %vm1615 = vcmp.lt.s32.totalorder %v1605, 0
          %vm1616 = vcmp.lt.s32.totalorder %v1612, 0
          %vm1617 = vmand %vm1615, %vm1613
          %vm1618 = vmand %vm1616, %vm1614
          %v1619 = vadd.s32 %v1605, 8
          %v1620 = vadd.s32 %v1612, 8
          %v1621 = vsel %vm1617, %v1619, %v1605
          %v1622 = vsel %vm1618, %v1620, %v1612
          %v1623 = vstv %s1595
          %v1624 = vadd.s32 %v1623, %v1621
          %v1625 = vadd.s32 %v1623, %v1622
          %s1626 = smul.u32 %s32, 8
          %v1627 = vlaneseq
          %v1628 = vand.u32 %v1627, 127
          %v1629 = vstv %s1626
          %v1630 = vadd.s32 %v1629, %v1628
          %vm1631 = vcmp.gt.s32.totalorder %v1630, %v1624
          %vm1632 = vcmp.gt.s32.totalorder %v1630, %v1625
          %v1633 = vsel %vm1631, -1e+30, %v1537
          %v1634 = vsel %vm1632, -1e+30, %v1540
          %v1635 = vsel %vm1631, -1e+30, %v1589
          %v1636 = vsel %vm1632, -1e+30, %v1592
          %v1637 = vld [vmem:[#allocation5] sm:$0xff]
          %v1638 = vld [vmem:[#allocation5 + $0x8] sm:$0xff]
          %v1639 = vld [vmem:[#allocation5 + $0x10] sm:$0xff]
          %v1640 = vld [vmem:[#allocation5 + $0x18] sm:$0xff]
          %v1641 = vsel %vm1150, %v1633, -inf
          %1642 = vmax.xlane.f32.xlu0 %v1641
          %v1643 = vpop.xlane.xlu0 %1642
          %v1644 = vsel %vm1150, %v1634, -inf
          %1645 = vmax.xlane.f32.xlu0 %v1644
          %v1646 = vpop.xlane.xlu0 %1645
          %v1647 = vsel %vm1150, %v1635, -inf
          %1648 = vmax.xlane.f32.xlu0 %v1647
          %v1649 = vpop.xlane.xlu0 %1648
          %v1650 = vsel %vm1150, %v1636, -inf
          %1651 = vmax.xlane.f32.xlu0 %v1650
          %v1652 = vpop.xlane.xlu0 %1651
          %v1653 = vmax.f32 %v1637, %v1643
          %v1654 = vmax.f32 %v1638, %v1646
          %v1655 = vmax.f32 %v1639, %v1649
          %v1656 = vmax.f32 %v1640, %v1652
          %v1657 = vsub.f32 %v1637, %v1653
          %v1658 = vsub.f32 %v1638, %v1654
          %v1659 = vsub.f32 %v1639, %v1655
          %v1660 = vsub.f32 %v1640, %v1656
          %v1661 = vmul.f32 %v1657, 1.442695
          %v1662 = vpow.pop %v1661
          %v1663 = vmul.f32 %v1658, 1.442695
          %v1664 = vpow.pop %v1663
          %v1665 = vmul.f32 %v1659, 1.442695
          %v1666 = vpow.pop %v1665
          %v1667 = vmul.f32 %v1660, 1.442695
          %v1668 = vpow.pop %v1667
          %1670 = vset.pattern.permute.xlu0 0
          %1671 = vperm.xlu0 %1670, %v1653
          %v1672 = vpop.permute.xlu0 %1671
          %1675 = vset.pattern.permute.xlu0 0
          %1676 = vperm.xlu0 %1675, %v1654
          %v1677 = vpop.permute.xlu0 %1676
          %1680 = vset.pattern.permute.xlu0 0
          %1681 = vperm.xlu0 %1680, %v1655
          %v1682 = vpop.permute.xlu0 %1681
          %1685 = vset.pattern.permute.xlu0 0
          %1686 = vperm.xlu0 %1685, %v1656
          %v1687 = vpop.permute.xlu0 %1686
          %v1689 = vsub.f32 %v1633, %v1672
          %v1690 = vsub.f32 %v1634, %v1677
          %v1691 = vsub.f32 %v1635, %v1682
          %v1692 = vsub.f32 %v1636, %v1687
          %v1693 = vmul.f32 %v1689, 1.442695
          %v1694 = vpow.pop %v1693
          %v1695 = vmul.f32 %v1690, 1.442695
          %v1696 = vpow.pop %v1695
          %v1697 = vmul.f32 %v1691, 1.442695
          %v1698 = vpow.pop %v1697
          %v1699 = vmul.f32 %v1692, 1.442695
          %v1700 = vpow.pop %v1699
          %v1701 = vld [vmem:[#allocation6] sm:$0xff]
          %v1702 = vld [vmem:[#allocation6 + $0x8] sm:$0xff]
          %v1703 = vld [vmem:[#allocation6 + $0x10] sm:$0xff]
          %v1704 = vld [vmem:[#allocation6 + $0x18] sm:$0xff]
          %v1705 = vmul.f32 %v1662, %v1701
          %v1706 = vmul.f32 %v1664, %v1702
          %v1707 = vmul.f32 %v1666, %v1703
          %v1708 = vmul.f32 %v1668, %v1704
          %v1709 = vsel %vm1150, %v1694, 0.0
          %1710 = vadd.xlane.f32.xlu0 %v1709
          %v1711 = vpop.xlane.xlu0 %1710
          %v1712 = vsel %vm1150, %v1696, 0.0
          %1713 = vadd.xlane.f32.xlu0 %v1712
          %v1714 = vpop.xlane.xlu0 %1713
          %v1715 = vsel %vm1150, %v1698, 0.0
          %1716 = vadd.xlane.f32.xlu0 %v1715
          %v1717 = vpop.xlane.xlu0 %1716
          %v1718 = vsel %vm1150, %v1700, 0.0
          %1719 = vadd.xlane.f32.xlu0 %v1718
          %v1720 = vpop.xlane.xlu0 %1719
          %v1721 = vadd.f32 %v1705, %v1711
          %v1722 = vadd.f32 %v1706, %v1714
          %v1723 = vadd.f32 %v1707, %v1717
          %v1724 = vadd.f32 %v1708, %v1720
          %vm1725 = vcmask 7168
          %1726 = vst.msk [vmem:[#allocation6] sm:$0xff] %vm1725, %v1721
          %1727 = vst.msk [vmem:[#allocation6 + $0x8] sm:$0xff] %vm1725, %v1722
          %1728 = vst.msk [vmem:[#allocation6 + $0x10] sm:$0xff] %vm1725, %v1723
          %1729 = vst.msk [vmem:[#allocation6 + $0x18] sm:$0xff] %vm1725, %v1724
          %v1730 = vld [vmem:[#allocation7] sm:$0xff]
          %v1731 = vld [vmem:[#allocation7 + $0x8] sm:$0xff]
          %v1732 = vld [vmem:[#allocation7 + $0x10] sm:$0xff]
          %v1733 = vld [vmem:[#allocation7 + $0x18] sm:$0xff]
          %1735 = vset.pattern.permute.xlu0 0
          %1736 = vperm.xlu0 %1735, %v1662
          %v1737 = vpop.permute.xlu0 %1736
          %1740 = vset.pattern.permute.xlu0 0
          %1741 = vperm.xlu0 %1740, %v1664
          %v1742 = vpop.permute.xlu0 %1741
          %1745 = vset.pattern.permute.xlu0 0
          %1746 = vperm.xlu0 %1745, %v1666
          %v1747 = vpop.permute.xlu0 %1746
          %1750 = vset.pattern.permute.xlu0 0
          %1751 = vperm.xlu0 %1750, %v1668
          %v1752 = vpop.permute.xlu0 %1751
          %v1754 = vmul.f32 %v1737, %v1730
          %v1755 = vmul.f32 %v1742, %v1731
          %v1756 = vmul.f32 %v1747, %v1732
          %v1757 = vmul.f32 %v1752, %v1733
          %v1758 = vpack.c.bf16 %v1696, %v1694
          %v1759 = vpack.c.bf16 %v1700, %v1698
          %v1761 = vsel %vm1150, %v1758, 0
          %vm1763 = vcmask 1043456
          %v1765 = vsel %vm1763, %v1489, 0
          %1767 = vmatprep.subr.bf16.mxu0 0
          %1768 = vmatpush1.bf16.msra.mxu0 0
          %1769 = vmatprep.subr.bf16.mxu0 0
          %1770 = vmatpush1.bf16.msra.mxu0 0
          %1771 = vmatprep.subr.bf16.mxu0 0
          %1772 = vmatpush1.bf16.msra.mxu0 0
          %1773 = vmatprep.subr.bf16.mxu0 0
          %1774 = vmatpush1.bf16.msra.mxu0 0
          %1775 = vmatprep.subr.bf16.mxu0 0
          %1776 = vmatpush1.bf16.msra.mxu0 0
          %1777 = vmatprep.subr.bf16.mxu0 0
          %1778 = vmatpush1.bf16.msra.mxu0 0
          %1779 = vmatprep.subr.bf16.mxu0 0
          %1780 = vmatpush1.bf16.msra.mxu0 0
          %1781 = vmatprep.subr.bf16.mxu0 0
          %1782 = vmatpush1.bf16.msra.mxu0 %v1765
          %1783 = vmatprep.subr.bf16.mxu0 0
          %1784 = vmatpush2.bf16.msra.mxu0 0
          %1785 = vmatprep.subr.bf16.mxu0 0
          %1786 = vmatpush2.bf16.msra.mxu0 0
          %1787 = vmatprep.subr.bf16.mxu0 0
          %1788 = vmatpush2.bf16.msra.mxu0 0
          %1789 = vmatprep.subr.bf16.mxu0 0
          %1790 = vmatpush2.bf16.msra.mxu0 0
          %1791 = vmatprep.subr.bf16.mxu0 0
          %1792 = vmatpush2.bf16.msra.mxu0 0
          %1793 = vmatprep.subr.bf16.mxu0 0
          %1794 = vmatpush2.bf16.msra.mxu0 0
          %1795 = vmatprep.subr.bf16.mxu0 0
          %1796 = vmatpush2.bf16.msra.mxu0 0
          %1797 = vmatprep.subr.bf16.mxu0 0
          %1798 = vmatpush2.bf16.msra.mxu0 0
          %1799 = vmatprep.mubr.bf16.mxu0 0
          %1800 = vmatmul.mubr.bf16.gmra.mxu0 %v1761
          %v1801 = vpop.f32.mrf.mxu0
          %v1802 = vadd.f32 0.0, %v1801
          %v1803 = vpop.f32.mrf.mxu0
          %v1804 = vpop.f32.mrf.mxu0
          %v1805 = vadd.f32 0.0, %v1804
          %v1806 = vpop.f32.mrf.mxu0
          %1807 = vdwg.mxu0
          %v1809 = vsel %vm1150, %v1759, 0
          %v1812 = vsel %vm1763, %v1490, 0
          %1814 = vmatprep.subr.bf16.mxu0 0
          %1815 = vmatpush1.bf16.msra.mxu0 0
          %1816 = vmatprep.subr.bf16.mxu0 0
          %1817 = vmatpush1.bf16.msra.mxu0 0
          %1818 = vmatprep.subr.bf16.mxu0 0
          %1819 = vmatpush1.bf16.msra.mxu0 0
          %1820 = vmatprep.subr.bf16.mxu0 0
          %1821 = vmatpush1.bf16.msra.mxu0 0
          %1822 = vmatprep.subr.bf16.mxu0 0
          %1823 = vmatpush1.bf16.msra.mxu0 0
          %1824 = vmatprep.subr.bf16.mxu0 0
          %1825 = vmatpush1.bf16.msra.mxu0 0
          %1826 = vmatprep.subr.bf16.mxu0 0
          %1827 = vmatpush1.bf16.msra.mxu0 0
          %1828 = vmatprep.subr.bf16.mxu0 0
          %1829 = vmatpush1.bf16.msra.mxu0 %v1812
          %1830 = vmatprep.subr.bf16.mxu0 0
          %1831 = vmatpush2.bf16.msra.mxu0 0
          %1832 = vmatprep.subr.bf16.mxu0 0
          %1833 = vmatpush2.bf16.msra.mxu0 0
          %1834 = vmatprep.subr.bf16.mxu0 0
          %1835 = vmatpush2.bf16.msra.mxu0 0
          %1836 = vmatprep.subr.bf16.mxu0 0
          %1837 = vmatpush2.bf16.msra.mxu0 0
          %1838 = vmatprep.subr.bf16.mxu0 0
          %1839 = vmatpush2.bf16.msra.mxu0 0
          %1840 = vmatprep.subr.bf16.mxu0 0
          %1841 = vmatpush2.bf16.msra.mxu0 0
          %1842 = vmatprep.subr.bf16.mxu0 0
          %1843 = vmatpush2.bf16.msra.mxu0 0
          %1844 = vmatprep.subr.bf16.mxu0 0
          %1845 = vmatpush2.bf16.msra.mxu0 0
          %1846 = vmatprep.mubr.bf16.mxu0 0
          %1847 = vmatmul.mubr.bf16.gmra.mxu0 %v1809
          %v1848 = vpop.f32.mrf.mxu0
          %v1849 = vadd.f32 0.0, %v1848
          %v1850 = vpop.f32.mrf.mxu0
          %v1851 = vpop.f32.mrf.mxu0
          %v1852 = vadd.f32 0.0, %v1851
          %v1853 = vpop.f32.mrf.mxu0
          %1854 = vdwg.mxu0
          %v1855 = vadd.f32 %v1754, %v1802
          %v1856 = vadd.f32 %v1755, %v1805
          %v1857 = vadd.f32 %v1756, %v1849
          %v1858 = vadd.f32 %v1757, %v1852
          %1859 = vst.msk [vmem:[#allocation7] sm:$0xff] %vm1150, %v1855
          %1860 = vst.msk [vmem:[#allocation7 + $0x8] sm:$0xff] %vm1150, %v1856
          %1861 = vst.msk [vmem:[#allocation7 + $0x10] sm:$0xff] %vm1150, %v1857
          %1862 = vst.msk [vmem:[#allocation7 + $0x18] sm:$0xff] %vm1150, %v1858
          %1863 = vst.msk [vmem:[#allocation5] sm:$0xff] %vm1725, %v1653
          %1864 = vst.msk [vmem:[#allocation5 + $0x8] sm:$0xff] %vm1725, %v1654
          %1865 = vst.msk [vmem:[#allocation5 + $0x10] sm:$0xff] %vm1725, %v1655
          %1866 = vst.msk [vmem:[#allocation5 + $0x18] sm:$0xff] %vm1725, %v1656
          %p1867 = scmp.eq.s32.totalorder %s32, %s31
          // Predicated region
          $region73: #{tpu_custom_call.1} parent=67 // pred_check
            %p1868 = pneg %p1867
          $region74: #{tpu_custom_call.1} parent=67 // pred_check_branch
            %1870 = sbr.rel (%p1868) target = $region76
          $region75: #{tpu_custom_call.1} parent=67 // pred_region
            %v1871 = vld [vmem:[#allocation7] sm:$0xff]
            %v1872 = vld [vmem:[#allocation7 + $0x8] sm:$0xff]
            %v1873 = vld [vmem:[#allocation7 + $0x10] sm:$0xff]
            %v1874 = vld [vmem:[#allocation7 + $0x18] sm:$0xff]
            %v1875 = vld [vmem:[#allocation6] sm:$0xff]
            %v1876 = vld [vmem:[#allocation6 + $0x8] sm:$0xff]
            %v1877 = vld [vmem:[#allocation6 + $0x10] sm:$0xff]
            %v1878 = vld [vmem:[#allocation6 + $0x18] sm:$0xff]
            %v1879 = vrcp.pop %v1875
            %v1880 = vrcp.pop %v1876
            %v1881 = vrcp.pop %v1877
            %v1882 = vrcp.pop %v1878
            %1884 = vset.pattern.permute.xlu0 0
            %1885 = vperm.xlu0 %1884, %v1879
            %v1886 = vpop.permute.xlu0 %1885
            %1889 = vset.pattern.permute.xlu0 0
            %1890 = vperm.xlu0 %1889, %v1880
            %v1891 = vpop.permute.xlu0 %1890
            %1894 = vset.pattern.permute.xlu0 0
            %1895 = vperm.xlu0 %1894, %v1881
            %v1896 = vpop.permute.xlu0 %1895
            %1899 = vset.pattern.permute.xlu0 0
            %1900 = vperm.xlu0 %1899, %v1882
            %v1901 = vpop.permute.xlu0 %1900
            %v1903 = vmul.f32 %v1871, %v1886
            %v1904 = vmul.f32 %v1872, %v1891
            %v1905 = vmul.f32 %v1873, %v1896
            %v1906 = vmul.f32 %v1874, %v1901
            %v1907 = vpack.c.bf16 %v1903, %v1903
            %v1908 = vld [vmem:[%s5] sm:$0xf]
            %v1910 = vsel %vm1150, %v1907, 0
            %v1913 = vsel %vm1763, %v1908, 0
            %1915 = vmatprep.subr.bf16.mxu0 0
            %1916 = vmatpush1.bf16.msra.mxu0 0
            %1917 = vmatprep.subr.bf16.mxu0 0
            %1918 = vmatpush1.bf16.msra.mxu0 0
            %1919 = vmatprep.subr.bf16.mxu0 0
            %1920 = vmatpush1.bf16.msra.mxu0 0
            %1921 = vmatprep.subr.bf16.mxu0 0
            %1922 = vmatpush1.bf16.msra.mxu0 0
            %1923 = vmatprep.subr.bf16.mxu0 0
            %1924 = vmatpush1.bf16.msra.mxu0 0
            %1925 = vmatprep.subr.bf16.mxu0 0
            %1926 = vmatpush1.bf16.msra.mxu0 0
            %1927 = vmatprep.subr.bf16.mxu0 0
            %1928 = vmatpush1.bf16.msra.mxu0 0
            %1929 = vmatprep.subr.bf16.mxu0 0
            %1930 = vmatpush1.bf16.msra.mxu0 %v1913
            %1931 = vmatprep.subr.bf16.mxu0 0
            %1932 = vmatpush2.bf16.msra.mxu0 0
            %1933 = vmatprep.subr.bf16.mxu0 0
            %1934 = vmatpush2.bf16.msra.mxu0 0
            %1935 = vmatprep.subr.bf16.mxu0 0
            %1936 = vmatpush2.bf16.msra.mxu0 0
            %1937 = vmatprep.subr.bf16.mxu0 0
            %1938 = vmatpush2.bf16.msra.mxu0 0
            %1939 = vmatprep.subr.bf16.mxu0 0
            %1940 = vmatpush2.bf16.msra.mxu0 0
            %1941 = vmatprep.subr.bf16.mxu0 0
            %1942 = vmatpush2.bf16.msra.mxu0 0
            %1943 = vmatprep.subr.bf16.mxu0 0
            %1944 = vmatpush2.bf16.msra.mxu0 0
            %1945 = vmatprep.subr.bf16.mxu0 0
            %1946 = vmatpush2.bf16.msra.mxu0 0
            %1947 = vmatprep.mubr.bf16.mxu0 0
            %1948 = vmatmul.mubr.bf16.gmra.mxu0 %v1910
            %v1949 = vpop.f32.mrf.mxu0
            %v1950 = vadd.f32 0.0, %v1949
            %v1951 = vpop.f32.mrf.mxu0
            %v1952 = vpop.f32.mrf.mxu0
            %v1953 = vpop.f32.mrf.mxu0
            %1954 = vdwg.mxu0
            %1955 = vst.msk [vmem:[%s479] sm:$0xff] %vm1105, %v1950
            %v1956 = vpack.c.bf16 %v1904, %v1904
            %s1957 = scalar_lea.vmem %s5, 4
            %v1958 = vld [vmem:[%s1957] sm:$0xf]
            %v1960 = vsel %vm1150, %v1956, 0
            %v1963 = vsel %vm1763, %v1958, 0
            %1965 = vmatprep.subr.bf16.mxu0 0
            %1966 = vmatpush1.bf16.msra.mxu0 0
            %1967 = vmatprep.subr.bf16.mxu0 0
            %1968 = vmatpush1.bf16.msra.mxu0 0
            %1969 = vmatprep.subr.bf16.mxu0 0
            %1970 = vmatpush1.bf16.msra.mxu0 0
            %1971 = vmatprep.subr.bf16.mxu0 0
            %1972 = vmatpush1.bf16.msra.mxu0 0
            %1973 = vmatprep.subr.bf16.mxu0 0
            %1974 = vmatpush1.bf16.msra.mxu0 0
            %1975 = vmatprep.subr.bf16.mxu0 0
            %1976 = vmatpush1.bf16.msra.mxu0 0
            %1977 = vmatprep.subr.bf16.mxu0 0
            %1978 = vmatpush1.bf16.msra.mxu0 0
            %1979 = vmatprep.subr.bf16.mxu0 0
            %1980 = vmatpush1.bf16.msra.mxu0 %v1963
            %1981 = vmatprep.subr.bf16.mxu0 0
            %1982 = vmatpush2.bf16.msra.mxu0 0
            %1983 = vmatprep.subr.bf16.mxu0 0
            %1984 = vmatpush2.bf16.msra.mxu0 0
            %1985 = vmatprep.subr.bf16.mxu0 0
            %1986 = vmatpush2.bf16.msra.mxu0 0
            %1987 = vmatprep.subr.bf16.mxu0 0
            %1988 = vmatpush2.bf16.msra.mxu0 0
            %1989 = vmatprep.subr.bf16.mxu0 0
            %1990 = vmatpush2.bf16.msra.mxu0 0
            %1991 = vmatprep.subr.bf16.mxu0 0
            %1992 = vmatpush2.bf16.msra.mxu0 0
            %1993 = vmatprep.subr.bf16.mxu0 0
            %1994 = vmatpush2.bf16.msra.mxu0 0
            %1995 = vmatprep.subr.bf16.mxu0 0
            %1996 = vmatpush2.bf16.msra.mxu0 0
            %1997 = vmatprep.mubr.bf16.mxu0 0
            %1998 = vmatmul.mubr.bf16.gmra.mxu0 %v1960
            %v1999 = vpop.f32.mrf.mxu0
            %v2000 = vadd.f32 0.0, %v1999
            %v2001 = vpop.f32.mrf.mxu0
            %v2002 = vpop.f32.mrf.mxu0
            %v2003 = vpop.f32.mrf.mxu0
            %2004 = vdwg.mxu0
            %v2005 = vld [vmem:[%s479] sm:$0xff]
            %v2006 = vadd.f32 %v2005, %v2000
            %2007 = vst.msk [vmem:[%s479] sm:$0xff] %vm1105, %v2006
            %v2008 = vpack.c.bf16 %v1905, %v1905
            %s2009 = scalar_lea.vmem %s5, 8
            %v2010 = vld [vmem:[%s2009] sm:$0xf]
            %v2012 = vsel %vm1150, %v2008, 0
            %v2015 = vsel %vm1763, %v2010, 0
            %2017 = vmatprep.subr.bf16.mxu0 0
            %2018 = vmatpush1.bf16.msra.mxu0 0
            %2019 = vmatprep.subr.bf16.mxu0 0
            %2020 = vmatpush1.bf16.msra.mxu0 0
            %2021 = vmatprep.subr.bf16.mxu0 0
            %2022 = vmatpush1.bf16.msra.mxu0 0
            %2023 = vmatprep.subr.bf16.mxu0 0
            %2024 = vmatpush1.bf16.msra.mxu0 0
            %2025 = vmatprep.subr.bf16.mxu0 0
            %2026 = vmatpush1.bf16.msra.mxu0 0
            %2027 = vmatprep.subr.bf16.mxu0 0
            %2028 = vmatpush1.bf16.msra.mxu0 0
            %2029 = vmatprep.subr.bf16.mxu0 0
            %2030 = vmatpush1.bf16.msra.mxu0 0
            %2031 = vmatprep.subr.bf16.mxu0 0
            %2032 = vmatpush1.bf16.msra.mxu0 %v2015
            %2033 = vmatprep.subr.bf16.mxu0 0
            %2034 = vmatpush2.bf16.msra.mxu0 0
            %2035 = vmatprep.subr.bf16.mxu0 0
            %2036 = vmatpush2.bf16.msra.mxu0 0
            %2037 = vmatprep.subr.bf16.mxu0 0
            %2038 = vmatpush2.bf16.msra.mxu0 0
            %2039 = vmatprep.subr.bf16.mxu0 0
            %2040 = vmatpush2.bf16.msra.mxu0 0
            %2041 = vmatprep.subr.bf16.mxu0 0
            %2042 = vmatpush2.bf16.msra.mxu0 0
            %2043 = vmatprep.subr.bf16.mxu0 0
            %2044 = vmatpush2.bf16.msra.mxu0 0
            %2045 = vmatprep.subr.bf16.mxu0 0
            %2046 = vmatpush2.bf16.msra.mxu0 0
            %2047 = vmatprep.subr.bf16.mxu0 0
            %2048 = vmatpush2.bf16.msra.mxu0 0
            %2049 = vmatprep.mubr.bf16.mxu0 0
            %2050 = vmatmul.mubr.bf16.gmra.mxu0 %v2012
            %v2051 = vpop.f32.mrf.mxu0
            %v2052 = vadd.f32 0.0, %v2051
            %v2053 = vpop.f32.mrf.mxu0
            %v2054 = vpop.f32.mrf.mxu0
            %v2055 = vpop.f32.mrf.mxu0
            %2056 = vdwg.mxu0
            %v2057 = vld [vmem:[%s479] sm:$0xff]
            %v2058 = vadd.f32 %v2057, %v2052
            %2059 = vst.msk [vmem:[%s479] sm:$0xff] %vm1105, %v2058
            %v2060 = vpack.c.bf16 %v1906, %v1906
            %s2061 = scalar_lea.vmem %s5, 12
            %v2062 = vld [vmem:[%s2061] sm:$0xf]
            %v2064 = vsel %vm1150, %v2060, 0
            %v2067 = vsel %vm1763, %v2062, 0
            %2069 = vmatprep.subr.bf16.mxu0 0
            %2070 = vmatpush1.bf16.msra.mxu0 0
            %2071 = vmatprep.subr.bf16.mxu0 0
            %2072 = vmatpush1.bf16.msra.mxu0 0
            %2073 = vmatprep.subr.bf16.mxu0 0
            %2074 = vmatpush1.bf16.msra.mxu0 0
            %2075 = vmatprep.subr.bf16.mxu0 0
            %2076 = vmatpush1.bf16.msra.mxu0 0
            %2077 = vmatprep.subr.bf16.mxu0 0
            %2078 = vmatpush1.bf16.msra.mxu0 0
            %2079 = vmatprep.subr.bf16.mxu0 0
            %2080 = vmatpush1.bf16.msra.mxu0 0
            %2081 = vmatprep.subr.bf16.mxu0 0
            %2082 = vmatpush1.bf16.msra.mxu0 0
            %2083 = vmatprep.subr.bf16.mxu0 0
            %2084 = vmatpush1.bf16.msra.mxu0 %v2067
            %2085 = vmatprep.subr.bf16.mxu0 0
            %2086 = vmatpush2.bf16.msra.mxu0 0
            %2087 = vmatprep.subr.bf16.mxu0 0
            %2088 = vmatpush2.bf16.msra.mxu0 0
            %2089 = vmatprep.subr.bf16.mxu0 0
            %2090 = vmatpush2.bf16.msra.mxu0 0
            %2091 = vmatprep.subr.bf16.mxu0 0
            %2092 = vmatpush2.bf16.msra.mxu0 0
            %2093 = vmatprep.subr.bf16.mxu0 0
            %2094 = vmatpush2.bf16.msra.mxu0 0
            %2095 = vmatprep.subr.bf16.mxu0 0
            %2096 = vmatpush2.bf16.msra.mxu0 0
            %2097 = vmatprep.subr.bf16.mxu0 0
            %2098 = vmatpush2.bf16.msra.mxu0 0
            %2099 = vmatprep.subr.bf16.mxu0 0
            %2100 = vmatpush2.bf16.msra.mxu0 0
            %2101 = vmatprep.mubr.bf16.mxu0 0
            %2102 = vmatmul.mubr.bf16.gmra.mxu0 %v2064
            %v2103 = vpop.f32.mrf.mxu0
            %v2104 = vadd.f32 0.0, %v2103
            %v2105 = vpop.f32.mrf.mxu0
            %v2106 = vpop.f32.mrf.mxu0
            %v2107 = vpop.f32.mrf.mxu0
            %2108 = vdwg.mxu0
            %v2109 = vld [vmem:[%s479] sm:$0xff]
            %v2110 = vadd.f32 %v2109, %v2104
            %2111 = vst.msk [vmem:[%s479] sm:$0xff] %vm1105, %v2110
          $region76: #{tpu_custom_call.1} parent=67 // pred_fallthru
            _
        $region68: #{tpu_custom_call.1} parent=63 // pred_fallthru
          _
        %s2112 = sand.u32 %s319, 1
        %s2113 = scalar_lea.sflag [#allocation9], %s2112
        %s2114 = sand.u32 %s319, 1
        %s2115 = smul.addr %s2114, 8
        %s2116 = scalar_lea.vmem [#allocation8], %s2115
        // Predicated region
        $region77: #{tpu_custom_call.1} parent=63 // pred_check
          %p2117 = pneg %p329
        $region78: #{tpu_custom_call.1} parent=63 // pred_check_branch
          %2119 = sbr.rel (%p2117) target = $region80
        $region79: #{tpu_custom_call.1} parent=63 // pred_region
          %s2121 = ssub.s32 128, 128
          %2122 = vsyncadd %s2113, %s2121
          %s2123 = sadd.s32 %s31, %s30
          %s2124 = smul.addr %s2123, 128
          %s2125 = scalar_lea.hbm %s11, %s2124
          %s2127 = sshll.u32 %s2116, 4
          %s2128 = int_to_ptr.vmem [resolvable:$true] %s2127
          %2130 = dma.vmem_to_hbm [thread:$0]  %s2128, 128, %s2125, %s2113
        $region80: #{tpu_custom_call.1} parent=63 // pred_fallthru
          _
      $region64: #{tpu_custom_call.1} parent=5 // pred_fallthru
        _
      %p2131 = scmp.le.s32.totalorder 2, %s20
      // Predicated region
      $region81: #{tpu_custom_call.1} parent=5 // pred_check
        %p2132 = pneg %p2131
      $region82: #{tpu_custom_call.1} parent=5 // pred_check_branch
        %2134 = sbr.rel (%p2132) target = $region84
      $region83: #{tpu_custom_call.1} parent=5 // pred_region
        %s2135 = ssub.s32 %s20, 2
        // Predicated region
        $region85: #{tpu_custom_call.1} parent=83 // pred_check
          %p2136 = pneg %p335
        $region86: #{tpu_custom_call.1} parent=83 // pred_check_branch
          %2138 = sbr.rel (%p2136) target = $region88
        $region87: #{tpu_custom_call.1} parent=83 // pred_region
          %s2139 = sand.u32 %s320, 1
          %s2140 = scalar_lea.sflag [#allocation9], %s2139
          %s2141 = sand.u32 %s320, 1
          %s2142 = smul.addr %s2141, 8
          %s2143 = scalar_lea.vmem [#allocation8], %s2142
          %2144 = dma.done %s2140, 128
        $region88: #{tpu_custom_call.1} parent=83 // pred_fallthru
          _
      $region84: #{tpu_custom_call.1} parent=5 // pred_fallthru
        _
    $region6: #{tpu_custom_call.1} parent=1 // loop_footer
      %s24 = sadd.s32 1, %s20
    $region7: #{tpu_custom_call.1} parent=1 // loop_footer_branch
      %19 = sbr.rel target = $region3
    $region8: #{tpu_custom_call.1} parent=1 // loop_exit
      _
    %2145 = vsyncpa [#allocation9], 1
    %s2146 = scalar_lea.sflag [#allocation9], 1
    %2147 = vsyncpa %s2146, 1

</llo_original>
